<compile_context>
chip_gen: v7x
topology: tpu7x:2x2x1
jax: 0.10.0
libtpu: 0.0.40
codegen_flags: <defaults>
</compile_context>

<pallas_src>
import functools

import jax
import jax.numpy as jnp
from jax.experimental import pallas as pl
from jax.experimental.pallas import tpu as pltpu

# ---- module constants (from LARA/data/model.py) ----
attr_num = 18
attr_dict_size = 2 * attr_num              # 36
attr_present_dim = 5
hidden_dim = 100
user_emb_dim = attr_num                    # 18
feat_dim = attr_num * attr_present_dim     # 90
in_dim = feat_dim + user_emb_dim           # 108

LANE = 128                                 # padded lane width for hidden/output dims
X_DIM = 2 * attr_num                       # 36: [ids (18) || user_emb (18)]
OH_DIM = attr_num * attr_dict_size         # 648: combined one-hot width (multiple of 8)


def _round_up(x, m):
    return ((x + m - 1) // m) * m


# ----------------- Pallas kernel: fused embedding + 3-layer MLP + sigmoid -----------------
def _disc_kernel(x_ref, e_ref, lm_ref, wf_ref, w1u_ref, b1_ref,
                 w2_ref, b2_ref, w3_ref, b3_ref, o_ref):
    x = x_ref[...]                                    # [TM, 36] bf16 (ids | user)

    # Broadcast the 18 id lanes to 648 lanes with a tiny 0/1 matmul (exact: ids < 256
    # are exactly representable in bf16, E rows for the user columns are zero).
    ids_exp = jnp.dot(x, e_ref[...], preferred_element_type=jnp.float32)   # [TM, 648]
    # Combined one-hot over all 18 attributes: lane L is hot iff ids[:, L//36] == L % 36.
    oh = (ids_exp == lm_ref[...]).astype(jnp.bfloat16)                     # [TM, 648]

    # ---- layer 1: one K=648 matmul (embedding folded into W1) + user part ----
    acc = jnp.dot(oh, wf_ref[...], preferred_element_type=jnp.float32)     # [TM, 128]
    acc = acc + jnp.dot(x, w1u_ref[...], preferred_element_type=jnp.float32)
    o1 = jnp.tanh(acc + b1_ref[...]).astype(jnp.bfloat16)

    # ---- layer 2 / layer 3 + sigmoid (padded lanes stay 0 / 0.5, sliced off outside) ----
    o2 = jnp.tanh(jnp.dot(o1, w2_ref[...], preferred_element_type=jnp.float32)
                  + b2_ref[...]).astype(jnp.bfloat16)
    o3 = jnp.dot(o2, w3_ref[...], preferred_element_type=jnp.float32) + b3_ref[...]
    y = pl.reciprocal(1.0 + jnp.exp(-o3), approx=True)
    o_ref[...] = y.astype(o_ref.dtype)


# ----------------- one-time parameter preparation (fold embedding, pad lanes) -----------------
def prepare_kernel_params(p):
    # wfused[j, v, :] = emb[v] @ W1[5j:5j+5, :]  -> embedding folded into layer 1.
    w1_attr = p["w1"][:feat_dim].reshape(attr_num, attr_present_dim, hidden_dim)
    wfused = jnp.einsum("vd,jdh->jvh", p["emb"], w1_attr)      # [18, 36, 100]
    wf2d = wfused.reshape(OH_DIM, hidden_dim)                  # [648, 100], row 36*j+v
    w1_user = p["w1"][feat_dim:]                               # [18, 100]

    # Expansion matrix: E[c, L] = 1 iff c == L // 36  (ids live in columns 0..17 of x,
    # so rows 18..35 are all zero and the user columns contribute nothing).
    lane = jnp.arange(OH_DIM)
    E = (jnp.arange(X_DIM)[:, None] == (lane // attr_dict_size)[None, :]).astype(jnp.float32)
    lane_mod = (lane % attr_dict_size).astype(jnp.float32)[None, :]        # [1, 648]

    # Layer-1 user-part weight aligned to the x layout (rows 0..17 zero).
    w1u = jnp.zeros((X_DIM, hidden_dim), jnp.float32).at[attr_num:, :].set(w1_user)

    def pad(a, shape, dtype):
        return jnp.pad(a, [(0, s - d) for d, s in zip(a.shape, shape)]).astype(dtype)

    return dict(
        E=E.astype(jnp.bfloat16),                          # [36, 648]
        lm=lane_mod,                                       # [1, 648]  f32
        wf=pad(wf2d, (OH_DIM, LANE), jnp.bfloat16),        # [648, 128]
        w1u=pad(w1u, (X_DIM, LANE), jnp.bfloat16),         # [36, 128]
        b1=pad(p["b1"], (1, LANE), jnp.float32),
        w2=pad(p["w2"], (LANE, LANE), jnp.bfloat16),
        b2=pad(p["b2"], (1, LANE), jnp.float32),
        w3=pad(p["w3"], (LANE, LANE), jnp.bfloat16),
        b3=pad(p["b3"], (1, LANE), jnp.float32),
    )


# ----------------- wrapper: batch tiling + pallas_call -----------------
@functools.partial(jax.jit, static_argnames=("tm",))
def discriminator_forward(attribute_id, user_emb, kp, *, tm=1024):
    B = attribute_id.shape[0]
    B8 = _round_up(B, 8)
    # Row tile: multiple of 8, capped so the grid has >=2 steps when B allows it
    # (keeps both v7x TensorCores busy; neutral on v5e/v6e).
    TM = max(8, min(int(tm), _round_up((B8 + 1) // 2, 8)))
    B_pad = _round_up(B, TM)

    # Single lane-packed input: ids (exact in bf16, values < 36) next to user_emb.
    x = jnp.concatenate([attribute_id.astype(jnp.bfloat16),
                         user_emb.astype(jnp.bfloat16)], axis=1)            # [B, 36]
    if B_pad != B:
        x = jnp.pad(x, ((0, B_pad - B), (0, 0)))

    const = lambda i: (0, 0)   # noqa: E731  (resident weights / constants)
    out = pl.pallas_call(
        _disc_kernel,
        out_shape=jax.ShapeDtypeStruct((B_pad, LANE), jnp.bfloat16),
        grid=(B_pad // TM,),
        in_specs=[
            pl.BlockSpec((TM, X_DIM), lambda i: (i, 0)),       # x (tiled)
            pl.BlockSpec((X_DIM, OH_DIM), const),              # expansion matrix E
            pl.BlockSpec((1, OH_DIM), const),                  # lane % 36 constant
            pl.BlockSpec((OH_DIM, LANE), const),               # fused layer-1 table
            pl.BlockSpec((X_DIM, LANE), const),                # layer-1 user part
            pl.BlockSpec((1, LANE), const),                    # b1
            pl.BlockSpec((LANE, LANE), const),                 # W2
            pl.BlockSpec((1, LANE), const),                    # b2
            pl.BlockSpec((LANE, LANE), const),                 # W3
            pl.BlockSpec((1, LANE), const),                    # b3
        ],
        out_specs=pl.BlockSpec((TM, LANE), lambda i: (i, 0)),
        compiler_params=pltpu.CompilerParams(
            dimension_semantics=("parallel",),
            vmem_limit_bytes=48 * 1024 * 1024),
    )(x, kp["E"], kp["lm"], kp["wf"], kp["w1u"], kp["b1"],
      kp["w2"], kp["b2"], kp["w3"], kp["b3"])

    return out[:B, :user_emb_dim].astype(jnp.float32)


# ----------------- deterministic (xavier-normal-ish) init -----------------
def xavier_normal(key, shape):
    fan_in, fan_out = shape[0], shape[1]
    std = jnp.sqrt(2.0 / (fan_in + fan_out))
    return std * jax.random.normal(key, shape, dtype=jnp.float32)


def init_params(key):
    ks = jax.random.split(key, 7)
    return dict(
        emb=xavier_normal(ks[0], (attr_dict_size, attr_present_dim)),
        w1=xavier_normal(ks[1], (in_dim, hidden_dim)),      # stored [in, out]
        b1=xavier_normal(ks[2], (1, hidden_dim)),
        w2=xavier_normal(ks[3], (hidden_dim, hidden_dim)),
        b2=xavier_normal(ks[4], (1, hidden_dim)),
        w3=xavier_normal(ks[5], (hidden_dim, user_emb_dim)),
        b3=xavier_normal(ks[6], (1, user_emb_dim)),
    )


# ----------------- pure-JAX f32 reference -----------------
def discriminator_ref(attribute_id, user_emb, p):
    attr = jnp.take(p["emb"], attribute_id, axis=0).reshape(-1, feat_dim)
    x = jnp.concatenate([attr, user_emb.astype(jnp.float32)], axis=1)
    o1 = jnp.tanh(x @ p["w1"] + p["b1"])
    o2 = jnp.tanh(o1 @ p["w2"] + p["b2"])
    o3 = o2 @ p["w3"] + p["b3"]
    return 1.0 / (1.0 + jnp.exp(-o3))


if __name__ == "__main__":
    key = jax.random.PRNGKey(0)
    pkey, ikey, ukey = jax.random.split(key, 3)
    params = init_params(pkey)
    kparams = prepare_kernel_params(params)

    # Test 1: arbitrary ids in [0, 36) (full nn.Embedding semantics), 2-step grid.
    B = 64
    attribute_id = jax.random.randint(ikey, (B, attr_num), 0, attr_dict_size, dtype=jnp.int32)
    user_emb = jax.random.normal(ukey, (B, user_emb_dim), dtype=jnp.float32)

    out = jax.block_until_ready(discriminator_forward(attribute_id, user_emb, kparams))
    ref = discriminator_ref(attribute_id, user_emb, params)
    assert out.shape == (B, user_emb_dim)
    err = float(jnp.max(jnp.abs(out - ref)))
    assert err < 2e-2, err   # bf16 MXU operands + bf16 output vs f32 reference

    # Test 2: LARA-structured ids (attr i in {2i, 2i+1}), padded batch, multi-tile grid.
    B2 = 20
    bits = jax.random.randint(jax.random.PRNGKey(1), (B2, attr_num), 0, 2, dtype=jnp.int32)
    attr2 = 2 * jnp.arange(attr_num, dtype=jnp.int32)[None, :] + bits
    user2 = jax.random.normal(jax.random.PRNGKey(2), (B2, user_emb_dim), dtype=jnp.float32)

    out2 = jax.block_until_ready(discriminator_forward(attr2, user2, kparams, tm=8))
    ref2 = discriminator_ref(attr2, user2, params)
    assert out2.shape == (B2, user_emb_dim)
    err2 = float(jnp.max(jnp.abs(out2 - ref2)))
    assert err2 < 2e-2, err2

    print("KERNEL_OK")
</pallas_src>

<mosaic_0001>
module attributes {stable_mosaic.version = 11 : i64} {
  func.func @_disc_kernel(%arg0: i32, %arg1: memref<32x36xbf16, #tpu.memory_space<vmem>>, %arg2: memref<36x648xbf16, #tpu.memory_space<vmem>>, %arg3: memref<1x648xf32, #tpu.memory_space<vmem>>, %arg4: memref<648x128xbf16, #tpu.memory_space<vmem>>, %arg5: memref<36x128xbf16, #tpu.memory_space<vmem>>, %arg6: memref<1x128xf32, #tpu.memory_space<vmem>>, %arg7: memref<128x128xbf16, #tpu.memory_space<vmem>>, %arg8: memref<1x128xf32, #tpu.memory_space<vmem>>, %arg9: memref<128x128xbf16, #tpu.memory_space<vmem>>, %arg10: memref<1x128xf32, #tpu.memory_space<vmem>>, %arg11: memref<32x128xbf16, #tpu.memory_space<vmem>>) attributes {dimension_semantics = [#tpu.dimension_semantics<parallel>], iteration_bounds = array<i64: 2>, scalar_prefetch = 0 : i64, scratch_operands = 0 : i64, tpu.core_type = #tpu.core_type<tc>, window_params = [{transform_indices = @transform_0, window_bounds = array<i64: 32, 36>}, {pipeline_mode = #tpu.pipeline_mode<synchronous>, transform_indices = @transform_1, window_bounds = array<i64: 36, 648>}, {pipeline_mode = #tpu.pipeline_mode<synchronous>, transform_indices = @transform_2, window_bounds = array<i64: 1, 648>}, {pipeline_mode = #tpu.pipeline_mode<synchronous>, transform_indices = @transform_3, window_bounds = array<i64: 648, 128>}, {pipeline_mode = #tpu.pipeline_mode<synchronous>, transform_indices = @transform_4, window_bounds = array<i64: 36, 128>}, {pipeline_mode = #tpu.pipeline_mode<synchronous>, transform_indices = @transform_5, window_bounds = array<i64: 1, 128>}, {pipeline_mode = #tpu.pipeline_mode<synchronous>, transform_indices = @transform_6, window_bounds = array<i64: 128, 128>}, {pipeline_mode = #tpu.pipeline_mode<synchronous>, transform_indices = @transform_7, window_bounds = array<i64: 1, 128>}, {pipeline_mode = #tpu.pipeline_mode<synchronous>, transform_indices = @transform_8, window_bounds = array<i64: 128, 128>}, {pipeline_mode = #tpu.pipeline_mode<synchronous>, transform_indices = @transform_9, window_bounds = array<i64: 1, 128>}, {transform_indices = @transform_10, window_bounds = array<i64: 32, 128>}]} {
    %c0 = arith.constant 0 : index
    %c0_0 = arith.constant 0 : index
    %0 = vector.load %arg1[%c0, %c0_0] : memref<32x36xbf16, #tpu.memory_space<vmem>>, vector<32x36xbf16>
    %c0_1 = arith.constant 0 : index
    %c0_2 = arith.constant 0 : index
    %1 = vector.load %arg2[%c0_1, %c0_2] : memref<36x648xbf16, #tpu.memory_space<vmem>>, vector<36x648xbf16>
    %cst = arith.constant dense<0.000000e+00> : vector<32x648xf32>
    %2 = tpu.matmul %0, %1, %cst {dimension_numbers = #tpu.dot_dimension_numbers<[1], [0], [0], [1], [0, 0, 1, 1], [], []>} : vector<32x36xbf16>, vector<36x648xbf16>, vector<32x648xf32> -> vector<32x648xf32>
    %c0_3 = arith.constant 0 : index
    %c0_4 = arith.constant 0 : index
    %3 = vector.load %arg3[%c0_3, %c0_4] : memref<1x648xf32, #tpu.memory_space<vmem>>, vector<1x648xf32>
    %4 = vector.broadcast %3 : vector<1x648xf32> to vector<32x648xf32>
    %5 = arith.cmpf oeq, %2, %4 : vector<32x648xf32>
    %6 = arith.extui %5 : vector<32x648xi1> to vector<32x648xi32>
    %7 = arith.sitofp %6 : vector<32x648xi32> to vector<32x648xf32>
    %8 = arith.truncf %7 : vector<32x648xf32> to vector<32x648xbf16>
    %c0_5 = arith.constant 0 : index
    %c0_6 = arith.constant 0 : index
    %9 = vector.load %arg4[%c0_5, %c0_6] : memref<648x128xbf16, #tpu.memory_space<vmem>>, vector<648x128xbf16>
    %cst_7 = arith.constant dense<0.000000e+00> : vector<32x128xf32>
    %10 = tpu.matmul %8, %9, %cst_7 {dimension_numbers = #tpu.dot_dimension_numbers<[1], [0], [0], [1], [0, 0, 1, 1], [], []>} : vector<32x648xbf16>, vector<648x128xbf16>, vector<32x128xf32> -> vector<32x128xf32>
    %c0_8 = arith.constant 0 : index
    %c0_9 = arith.constant 0 : index
    %11 = vector.load %arg5[%c0_8, %c0_9] : memref<36x128xbf16, #tpu.memory_space<vmem>>, vector<36x128xbf16>
    %cst_10 = arith.constant dense<0.000000e+00> : vector<32x128xf32>
    %12 = tpu.matmul %0, %11, %cst_10 {dimension_numbers = #tpu.dot_dimension_numbers<[1], [0], [0], [1], [0, 0, 1, 1], [], []>} : vector<32x36xbf16>, vector<36x128xbf16>, vector<32x128xf32> -> vector<32x128xf32>
    %13 = arith.addf %10, %12 : vector<32x128xf32>
    %c0_11 = arith.constant 0 : index
    %c0_12 = arith.constant 0 : index
    %14 = vector.load %arg6[%c0_11, %c0_12] : memref<1x128xf32, #tpu.memory_space<vmem>>, vector<1x128xf32>
    %15 = vector.broadcast %14 : vector<1x128xf32> to vector<32x128xf32>
    %16 = arith.addf %13, %15 : vector<32x128xf32>
    %17 = math.tanh %16 : vector<32x128xf32>
    %18 = arith.truncf %17 : vector<32x128xf32> to vector<32x128xbf16>
    %c0_13 = arith.constant 0 : index
    %c0_14 = arith.constant 0 : index
    %19 = vector.load %arg7[%c0_13, %c0_14] : memref<128x128xbf16, #tpu.memory_space<vmem>>, vector<128x128xbf16>
    %cst_15 = arith.constant dense<0.000000e+00> : vector<32x128xf32>
    %20 = tpu.matmul %18, %19, %cst_15 {dimension_numbers = #tpu.dot_dimension_numbers<[1], [0], [0], [1], [0, 0, 1, 1], [], []>} : vector<32x128xbf16>, vector<128x128xbf16>, vector<32x128xf32> -> vector<32x128xf32>
    %c0_16 = arith.constant 0 : index
    %c0_17 = arith.constant 0 : index
    %21 = vector.load %arg8[%c0_16, %c0_17] : memref<1x128xf32, #tpu.memory_space<vmem>>, vector<1x128xf32>
    %22 = vector.broadcast %21 : vector<1x128xf32> to vector<32x128xf32>
    %23 = arith.addf %20, %22 : vector<32x128xf32>
    %24 = math.tanh %23 : vector<32x128xf32>
    %25 = arith.truncf %24 : vector<32x128xf32> to vector<32x128xbf16>
    %c0_18 = arith.constant 0 : index
    %c0_19 = arith.constant 0 : index
    %26 = vector.load %arg9[%c0_18, %c0_19] : memref<128x128xbf16, #tpu.memory_space<vmem>>, vector<128x128xbf16>
    %cst_20 = arith.constant dense<0.000000e+00> : vector<32x128xf32>
    %27 = tpu.matmul %25, %26, %cst_20 {dimension_numbers = #tpu.dot_dimension_numbers<[1], [0], [0], [1], [0, 0, 1, 1], [], []>} : vector<32x128xbf16>, vector<128x128xbf16>, vector<32x128xf32> -> vector<32x128xf32>
    %c0_21 = arith.constant 0 : index
    %c0_22 = arith.constant 0 : index
    %28 = vector.load %arg10[%c0_21, %c0_22] : memref<1x128xf32, #tpu.memory_space<vmem>>, vector<1x128xf32>
    %29 = vector.broadcast %28 : vector<1x128xf32> to vector<32x128xf32>
    %30 = arith.addf %27, %29 : vector<32x128xf32>
    %cst_23 = arith.constant 0.000000e+00 : f32
    %31 = vector.broadcast %cst_23 : f32 to vector<32x128xf32>
    %32 = arith.subf %31, %30 : vector<32x128xf32>
    %33 = math.exp %32 : vector<32x128xf32>
    %cst_24 = arith.constant 1.000000e+00 : f32
    %34 = vector.broadcast %cst_24 : f32 to vector<32x128xf32>
    %35 = arith.addf %34, %33 : vector<32x128xf32>
    %36 = tpu.reciprocal %35 {approx = true} : vector<32x128xf32> -> vector<32x128xf32>
    %37 = arith.truncf %36 : vector<32x128xf32> to vector<32x128xbf16>
    %c0_25 = arith.constant 0 : index
    %c0_26 = arith.constant 0 : index
    %38 = vector.load %arg11[%c0_25, %c0_26] : memref<32x128xbf16, #tpu.memory_space<vmem>>, vector<32x128xbf16>
    tpu.vector_store %arg11[%c0_25, %c0_26], %37 {strides = array<i32>} : memref<32x128xbf16, #tpu.memory_space<vmem>>, vector<32x128xbf16>,
    return
  }
  func.func @transform_0(%arg0: i32) -> (i32, i32) {
    %c0_i32 = arith.constant 0 : i32
    %c0_i32_0 = arith.constant 0 : i32
    return %arg0, %c0_i32 : i32, i32
  }
  func.func @transform_1(%arg0: i32) -> (i32, i32) {
    %c0_i32 = arith.constant 0 : i32
    %c0_i32_0 = arith.constant 0 : i32
    %c0_i32_1 = arith.constant 0 : i32
    return %c0_i32, %c0_i32_0 : i32, i32
  }
  func.func @transform_2(%arg0: i32) -> (i32, i32) {
    %c0_i32 = arith.constant 0 : i32
    %c0_i32_0 = arith.constant 0 : i32
    %c0_i32_1 = arith.constant 0 : i32
    return %c0_i32, %c0_i32_0 : i32, i32
  }
  func.func @transform_3(%arg0: i32) -> (i32, i32) {
    %c0_i32 = arith.constant 0 : i32
    %c0_i32_0 = arith.constant 0 : i32
    %c0_i32_1 = arith.constant 0 : i32
    return %c0_i32, %c0_i32_0 : i32, i32
  }
  func.func @transform_4(%arg0: i32) -> (i32, i32) {
    %c0_i32 = arith.constant 0 : i32
    %c0_i32_0 = arith.constant 0 : i32
    %c0_i32_1 = arith.constant 0 : i32
    return %c0_i32, %c0_i32_0 : i32, i32
  }
  func.func @transform_5(%arg0: i32) -> (i32, i32) {
    %c0_i32 = arith.constant 0 : i32
    %c0_i32_0 = arith.constant 0 : i32
    %c0_i32_1 = arith.constant 0 : i32
    return %c0_i32, %c0_i32_0 : i32, i32
  }
  func.func @transform_6(%arg0: i32) -> (i32, i32) {
    %c0_i32 = arith.constant 0 : i32
    %c0_i32_0 = arith.constant 0 : i32
    %c0_i32_1 = arith.constant 0 : i32
    return %c0_i32, %c0_i32_0 : i32, i32
  }
  func.func @transform_7(%arg0: i32) -> (i32, i32) {
    %c0_i32 = arith.constant 0 : i32
    %c0_i32_0 = arith.constant 0 : i32
    %c0_i32_1 = arith.constant 0 : i32
    return %c0_i32, %c0_i32_0 : i32, i32
  }
  func.func @transform_8(%arg0: i32) -> (i32, i32) {
    %c0_i32 = arith.constant 0 : i32
    %c0_i32_0 = arith.constant 0 : i32
    %c0_i32_1 = arith.constant 0 : i32
    return %c0_i32, %c0_i32_0 : i32, i32
  }
  func.func @transform_9(%arg0: i32) -> (i32, i32) {
    %c0_i32 = arith.constant 0 : i32
    %c0_i32_0 = arith.constant 0 : i32
    %c0_i32_1 = arith.constant 0 : i32
    return %c0_i32, %c0_i32_0 : i32, i32
  }
  func.func @transform_10(%arg0: i32) -> (i32, i32) {
    %c0_i32 = arith.constant 0 : i32
    %c0_i32_0 = arith.constant 0 : i32
    return %arg0, %c0_i32 : i32, i32
  }
}

</mosaic_0001>

<llo_original>
// kernel: discriminator_forward.1
$region0: #{discriminator_forward.1}
  #allocation0 [shape = 'u32[]', space=smem, size = 0x4, offset = 0x4, fixed_abs, tag = 'smem constant byte address 0x4 - core index']
  #allocation1 [shape = 'u32[144,128]{1,0:T(1,128)}', space=vmem, size = 0x12000, scoped, tag = 'internal scratch']
  %s0 = inlined_call_operand.vmem [shape: bf16[64,36], index: 0, kind: input, shape index: {}]
  %s1 = inlined_call_operand.vmem [shape: bf16[36,648], index: 1, kind: input, shape index: {}]
  %s2 = inlined_call_operand.vmem [shape: f32[1,648], index: 2, kind: input, shape index: {}]
  %s3 = inlined_call_operand.hbm [shape: bf16[648,128], index: 3, kind: input, shape index: {}]
  %s4 = inlined_call_operand.vmem [shape: bf16[36,128], index: 4, kind: input, shape index: {}]
  %s5 = inlined_call_operand.hbm [shape: f32[1,128], index: 5, kind: input, shape index: {}]
  %s6 = inlined_call_operand.vmem [shape: bf16[128,128], index: 6, kind: input, shape index: {}]
  %s7 = inlined_call_operand.hbm [shape: f32[1,128], index: 7, kind: input, shape index: {}]
  %s8 = inlined_call_operand.vmem [shape: bf16[128,128], index: 8, kind: input, shape index: {}]
  %s9 = inlined_call_operand.hbm [shape: f32[1,128], index: 9, kind: input, shape index: {}]
  %s10 = inlined_call_operand.vmem [shape: bf16[64,128], index: 10, kind: output, shape index: {}]
  %s11 = sld [smem:[#allocation0]]
  $region89: #{discriminator_forward.1} parent=0
    _
  %s13 = ssub.s32 1, %s11
  %s14 = scalar_select 0, %s13, %s11
  $region1: #{discriminator_forward.1} parent=0
    #allocation2 [shape = 'u8[165888]{0}', space=vmem, size = 0x28800, scoped, tag = 'input window, operand 3, single buffered']
    #allocation3 [shape = 's32[2]{0}', space=sflag, size = 0x8, scoped, tag = 'scoped memory for discriminator_forward.1']
    #allocation4 [shape = 'u8[512]{0}', space=vmem, size = 0x400, scoped, tag = 'input window, operand 5, single buffered']
    #allocation5 [shape = 's32[1]{0}', space=sflag, size = 0x4, scoped, tag = 'scoped memory for discriminator_forward.1']
    #allocation6 [shape = 'u8[512]{0}', space=vmem, size = 0x400, scoped, tag = 'input window, operand 7, single buffered']
    #allocation7 [shape = 'u8[512]{0}', space=vmem, size = 0x400, scoped, tag = 'input window, operand 9, single buffered']
    #allocation8 [shape = 's32[1]{0}', space=sflag, size = 0x4, scoped, tag = 'scoped memory for discriminator_forward.1']
    %15 = vsyncpa [#allocation3], 0
    %16 = vsyncpa [#allocation5], 0
    %17 = vsyncpa [#allocation8], 0
    loop: start=0, step=1, limit=4
    $region2: #{discriminator_forward.1} parent=1 // loop_pre_header
      _
    $region3: #{discriminator_forward.1} parent=1 // loop_header
      %s19 = sphi 0, %s23
      %p20 = scmp.ge.s32.totalorder %s19, 4
      %s29 = sphi 0, %s31
      %s32 = sphi 0, %s29
      %s33 = sphi 0, %s32
      %s49 = sphi 0, %s33
      %s53 = sphi 0, %s53
      %s55 = sphi 0, %s53
      %s56 = sphi 0, %s55
      %s70 = sphi 0, %s56
      %s74 = sphi 0, %s74
      %s76 = sphi 0, %s74
      %s77 = sphi 0, %s76
      %s91 = sphi 0, %s77
      %s95 = sphi 0, %s95
      %s97 = sphi 0, %s95
      %s98 = sphi 0, %s97
      %s112 = sphi 0, %s98
      %s116 = sphi 0, %s116
      %s118 = sphi 0, %s116
      %s119 = sphi 0, %s118
      %s133 = sphi 0, %s119
      %s137 = sphi 0, %s137
      %s139 = sphi 0, %s137
      %s140 = sphi 0, %s139
      %s154 = sphi 0, %s140
      %s158 = sphi 0, %s158
      %s160 = sphi 0, %s158
      %s161 = sphi 0, %s160
      %s175 = sphi 0, %s161
      %s179 = sphi 0, %s179
      %s181 = sphi 0, %s179
      %s182 = sphi 0, %s181
      %s196 = sphi 0, %s182
      %s200 = sphi 0, %s200
      %s202 = sphi 0, %s200
      %s203 = sphi 0, %s202
      %s217 = sphi 0, %s203
      %s221 = sphi 0, %s221
      %s223 = sphi 0, %s221
      %s224 = sphi 0, %s223
      %s238 = sphi 0, %s224
      %s244 = sphi 0, %s246
      %s247 = sphi 0, %s244
      %s248 = sphi 0, %s247
      %s264 = sphi 0, %s248
    $region4: #{discriminator_forward.1} parent=1 // loop_header_branch
      %22 = sbr.rel (%p20) target = $region8
    $region5: #{discriminator_forward.1} parent=1 // loop_body
      %s24 = ssub.s32 %s19, 1
      %s25 = ssub.s32 %s19, 2
      %s26 = sadd.s32 %s19, 1
      %s27 = ssub.s32 %s19, %s26
      %p28 = scmp.eq.s32.totalorder %s27, 0
      %s30 = sadd.s32 %s29, 1
      %s31 = scalar_select %p28, %s29, %s30
      %p34 = pneg %p28
      %p35 = scmp.eq.s32.totalorder %s19, 1
      %p36 = por %p34, %p35
      %p37 = scmp.ne.s32.totalorder %s29, %s32
      %p38 = scmp.eq.s32.totalorder %s19, 0
      %p39 = por %p37, %p38
      %p40 = scmp.ne.s32.totalorder %s29, %s32
      %p41 = scmp.eq.s32.totalorder %s24, 1
      %p42 = por %p40, %p41
      %p43 = scmp.ne.s32.totalorder %s32, %s33
      %p44 = scmp.eq.s32.totalorder %s24, 0
      %p45 = por %p43, %p44
      %p46 = scmp.ne.s32.totalorder %s32, %s33
      %p47 = scmp.eq.s32.totalorder %s25, 1
      %p48 = por %p46, %p47
      %p50 = scmp.ne.s32.totalorder %s33, %s49
      %p51 = scmp.eq.s32.totalorder %s25, 0
      %p52 = por %p50, %p51
      %s54 = sadd.s32 %s53, 1
      %p57 = scmp.eq.s32.totalorder %s19, 1
      %p58 = scmp.ne.s32.totalorder %s53, %s55
      %p59 = scmp.eq.s32.totalorder %s19, 0
      %p60 = por %p58, %p59
      %p61 = scmp.ne.s32.totalorder %s53, %s55
      %p62 = scmp.eq.s32.totalorder %s24, 1
      %p63 = por %p61, %p62
      %p64 = scmp.ne.s32.totalorder %s55, %s56
      %p65 = scmp.eq.s32.totalorder %s24, 0
      %p66 = por %p64, %p65
      %p67 = scmp.ne.s32.totalorder %s55, %s56
      %p68 = scmp.eq.s32.totalorder %s25, 1
      %p69 = por %p67, %p68
      %p71 = scmp.ne.s32.totalorder %s56, %s70
      %p72 = scmp.eq.s32.totalorder %s25, 0
      %p73 = por %p71, %p72
      %s75 = sadd.s32 %s74, 1
      %p78 = scmp.eq.s32.totalorder %s19, 1
      %p79 = scmp.ne.s32.totalorder %s74, %s76
      %p80 = scmp.eq.s32.totalorder %s19, 0
      %p81 = por %p79, %p80
      %p82 = scmp.ne.s32.totalorder %s74, %s76
      %p83 = scmp.eq.s32.totalorder %s24, 1
      %p84 = por %p82, %p83
      %p85 = scmp.ne.s32.totalorder %s76, %s77
      %p86 = scmp.eq.s32.totalorder %s24, 0
      %p87 = por %p85, %p86
      %p88 = scmp.ne.s32.totalorder %s76, %s77
      %p89 = scmp.eq.s32.totalorder %s25, 1
      %p90 = por %p88, %p89
      %p92 = scmp.ne.s32.totalorder %s77, %s91
      %p93 = scmp.eq.s32.totalorder %s25, 0
      %p94 = por %p92, %p93
      %s96 = sadd.s32 %s95, 1
      %p99 = scmp.eq.s32.totalorder %s19, 1
      %p100 = scmp.ne.s32.totalorder %s95, %s97
      %p101 = scmp.eq.s32.totalorder %s19, 0
      %p102 = por %p100, %p101
      %p103 = scmp.ne.s32.totalorder %s95, %s97
      %p104 = scmp.eq.s32.totalorder %s24, 1
      %p105 = por %p103, %p104
      %p106 = scmp.ne.s32.totalorder %s97, %s98
      %p107 = scmp.eq.s32.totalorder %s24, 0
      %p108 = por %p106, %p107
      %p109 = scmp.ne.s32.totalorder %s97, %s98
      %p110 = scmp.eq.s32.totalorder %s25, 1
      %p111 = por %p109, %p110
      %p113 = scmp.ne.s32.totalorder %s98, %s112
      %p114 = scmp.eq.s32.totalorder %s25, 0
      %p115 = por %p113, %p114
      %s117 = sadd.s32 %s116, 1
      %p120 = scmp.eq.s32.totalorder %s19, 1
      %p121 = scmp.ne.s32.totalorder %s116, %s118
      %p122 = scmp.eq.s32.totalorder %s19, 0
      %p123 = por %p121, %p122
      %p124 = scmp.ne.s32.totalorder %s116, %s118
      %p125 = scmp.eq.s32.totalorder %s24, 1
      %p126 = por %p124, %p125
      %p127 = scmp.ne.s32.totalorder %s118, %s119
      %p128 = scmp.eq.s32.totalorder %s24, 0
      %p129 = por %p127, %p128
      %p130 = scmp.ne.s32.totalorder %s118, %s119
      %p131 = scmp.eq.s32.totalorder %s25, 1
      %p132 = por %p130, %p131
      %p134 = scmp.ne.s32.totalorder %s119, %s133
      %p135 = scmp.eq.s32.totalorder %s25, 0
      %p136 = por %p134, %p135
      %s138 = sadd.s32 %s137, 1
      %p141 = scmp.eq.s32.totalorder %s19, 1
      %p142 = scmp.ne.s32.totalorder %s137, %s139
      %p143 = scmp.eq.s32.totalorder %s19, 0
      %p144 = por %p142, %p143
      %p145 = scmp.ne.s32.totalorder %s137, %s139
      %p146 = scmp.eq.s32.totalorder %s24, 1
      %p147 = por %p145, %p146
      %p148 = scmp.ne.s32.totalorder %s139, %s140
      %p149 = scmp.eq.s32.totalorder %s24, 0
      %p150 = por %p148, %p149
      %p151 = scmp.ne.s32.totalorder %s139, %s140
      %p152 = scmp.eq.s32.totalorder %s25, 1
      %p153 = por %p151, %p152
      %p155 = scmp.ne.s32.totalorder %s140, %s154
      %p156 = scmp.eq.s32.totalorder %s25, 0
      %p157 = por %p155, %p156
      %s159 = sadd.s32 %s158, 1
      %p162 = scmp.eq.s32.totalorder %s19, 1
      %p163 = scmp.ne.s32.totalorder %s158, %s160
      %p164 = scmp.eq.s32.totalorder %s19, 0
      %p165 = por %p163, %p164
      %p166 = scmp.ne.s32.totalorder %s158, %s160
      %p167 = scmp.eq.s32.totalorder %s24, 1
      %p168 = por %p166, %p167
      %p169 = scmp.ne.s32.totalorder %s160, %s161
      %p170 = scmp.eq.s32.totalorder %s24, 0
      %p171 = por %p169, %p170
      %p172 = scmp.ne.s32.totalorder %s160, %s161
      %p173 = scmp.eq.s32.totalorder %s25, 1
      %p174 = por %p172, %p173
      %p176 = scmp.ne.s32.totalorder %s161, %s175
      %p177 = scmp.eq.s32.totalorder %s25, 0
      %p178 = por %p176, %p177
      %s180 = sadd.s32 %s179, 1
      %p183 = scmp.eq.s32.totalorder %s19, 1
      %p184 = scmp.ne.s32.totalorder %s179, %s181
      %p185 = scmp.eq.s32.totalorder %s19, 0
      %p186 = por %p184, %p185
      %p187 = scmp.ne.s32.totalorder %s179, %s181
      %p188 = scmp.eq.s32.totalorder %s24, 1
      %p189 = por %p187, %p188
      %p190 = scmp.ne.s32.totalorder %s181, %s182
      %p191 = scmp.eq.s32.totalorder %s24, 0
      %p192 = por %p190, %p191
      %p193 = scmp.ne.s32.totalorder %s181, %s182
      %p194 = scmp.eq.s32.totalorder %s25, 1
      %p195 = por %p193, %p194
      %p197 = scmp.ne.s32.totalorder %s182, %s196
      %p198 = scmp.eq.s32.totalorder %s25, 0
      %p199 = por %p197, %p198
      %s201 = sadd.s32 %s200, 1
      %p204 = scmp.eq.s32.totalorder %s19, 1
      %p205 = scmp.ne.s32.totalorder %s200, %s202
      %p206 = scmp.eq.s32.totalorder %s19, 0
      %p207 = por %p205, %p206
      %p208 = scmp.ne.s32.totalorder %s200, %s202
      %p209 = scmp.eq.s32.totalorder %s24, 1
      %p210 = por %p208, %p209
      %p211 = scmp.ne.s32.totalorder %s202, %s203
      %p212 = scmp.eq.s32.totalorder %s24, 0
      %p213 = por %p211, %p212
      %p214 = scmp.ne.s32.totalorder %s202, %s203
      %p215 = scmp.eq.s32.totalorder %s25, 1
      %p216 = por %p214, %p215
      %p218 = scmp.ne.s32.totalorder %s203, %s217
      %p219 = scmp.eq.s32.totalorder %s25, 0
      %p220 = por %p218, %p219
      %s222 = sadd.s32 %s221, 1
      %p225 = scmp.eq.s32.totalorder %s19, 1
      %p226 = scmp.ne.s32.totalorder %s221, %s223
      %p227 = scmp.eq.s32.totalorder %s19, 0
      %p228 = por %p226, %p227
      %p229 = scmp.ne.s32.totalorder %s221, %s223
      %p230 = scmp.eq.s32.totalorder %s24, 1
      %p231 = por %p229, %p230
      %p232 = scmp.ne.s32.totalorder %s223, %s224
      %p233 = scmp.eq.s32.totalorder %s24, 0
      %p234 = por %p232, %p233
      %p235 = scmp.ne.s32.totalorder %s223, %s224
      %p236 = scmp.eq.s32.totalorder %s25, 1
      %p237 = por %p235, %p236
      %p239 = scmp.ne.s32.totalorder %s224, %s238
      %p240 = scmp.eq.s32.totalorder %s25, 0
      %p241 = por %p239, %p240
      %s242 = ssub.s32 %s19, %s26
      %p243 = scmp.eq.s32.totalorder %s242, 0
      %s245 = sadd.s32 %s244, 1
      %s246 = scalar_select %p243, %s244, %s245
      %p249 = pneg %p243
      %p250 = scmp.eq.s32.totalorder %s19, 1
      %p251 = por %p249, %p250
      %p252 = scmp.ne.s32.totalorder %s244, %s247
      %p253 = scmp.eq.s32.totalorder %s19, 0
      %p254 = por %p252, %p253
      %p255 = scmp.ne.s32.totalorder %s244, %s247
      %p256 = scmp.eq.s32.totalorder %s24, 1
      %p257 = por %p255, %p256
      %p258 = scmp.ne.s32.totalorder %s247, %s248
      %p259 = scmp.eq.s32.totalorder %s24, 0
      %p260 = por %p258, %p259
      %p261 = scmp.ne.s32.totalorder %s247, %s248
      %p262 = scmp.eq.s32.totalorder %s25, 1
      %p263 = por %p261, %p262
      %p265 = scmp.ne.s32.totalorder %s248, %s264
      %p266 = scmp.eq.s32.totalorder %s25, 0
      %p267 = por %p265, %p266
      %p268 = scmp.le.s32.totalorder 1, %s19
      %p269 = scmp.lt.s32.totalorder %s19, 3
      %p270 = pnand %p268, %p269
      %p271 = pneg %p270
      // Predicated region
      $region9: #{discriminator_forward.1} parent=5 // pred_check
        _
      $region10: #{discriminator_forward.1} parent=5 // pred_check_branch
        %273 = sbr.rel (%p270) target = $region12
      $region11: #{discriminator_forward.1} parent=5 // pred_region
        %s274 = ssub.s32 %s19, 1
        // Predicated region
        $region13: #{discriminator_forward.1} parent=11 // pred_check
          %p275 = pneg %p66
        $region14: #{discriminator_forward.1} parent=11 // pred_check_branch
          %277 = sbr.rel (%p275) target = $region16
        $region15: #{discriminator_forward.1} parent=11 // pred_region
          _
        $region16: #{discriminator_forward.1} parent=11 // pred_fallthru
          _
        // Predicated region
        $region17: #{discriminator_forward.1} parent=11 // pred_check
          %p278 = pneg %p87
        $region18: #{discriminator_forward.1} parent=11 // pred_check_branch
          %280 = sbr.rel (%p278) target = $region20
        $region19: #{discriminator_forward.1} parent=11 // pred_region
          _
        $region20: #{discriminator_forward.1} parent=11 // pred_fallthru
          _
        // Predicated region
        $region21: #{discriminator_forward.1} parent=11 // pred_check
          %p281 = pneg %p108
        $region22: #{discriminator_forward.1} parent=11 // pred_check_branch
          %283 = sbr.rel (%p281) target = $region24
        $region23: #{discriminator_forward.1} parent=11 // pred_region
          %s285 = ssub.s32 5184, 5184
          %286 = vsyncadd [#allocation3], %s285
          %s287 = sshll.u32 [#allocation2], 4
          %s288 = int_to_ptr.vmem [resolvable:$true] %s287
          %293 = dma.hbm_to_vmem [thread:$0]  %s3, 5184, %s288, [#allocation3], 64, 64, 4
        $region24: #{discriminator_forward.1} parent=11 // pred_fallthru
          _
        // Predicated region
        $region25: #{discriminator_forward.1} parent=11 // pred_check
          %p294 = pneg %p129
        $region26: #{discriminator_forward.1} parent=11 // pred_check_branch
          %296 = sbr.rel (%p294) target = $region28
        $region27: #{discriminator_forward.1} parent=11 // pred_region
          _
        $region28: #{discriminator_forward.1} parent=11 // pred_fallthru
          _
        // Predicated region
        $region29: #{discriminator_forward.1} parent=11 // pred_check
          %p297 = pneg %p150
        $region30: #{discriminator_forward.1} parent=11 // pred_check_branch
          %299 = sbr.rel (%p297) target = $region32
        $region31: #{discriminator_forward.1} parent=11 // pred_region
          %s301 = ssub.s32 16, 16
          %302 = vsyncadd [#allocation5], %s301
          %s304 = sshll.u32 [#allocation4], 4
          %s305 = int_to_ptr.vmem [resolvable:$true] %s304
          %307 = dma.hbm_to_vmem [thread:$0]  %s5, 16, %s305, [#allocation5]
        $region32: #{discriminator_forward.1} parent=11 // pred_fallthru
          _
        // Predicated region
        $region33: #{discriminator_forward.1} parent=11 // pred_check
          %p308 = pneg %p171
        $region34: #{discriminator_forward.1} parent=11 // pred_check_branch
          %310 = sbr.rel (%p308) target = $region36
        $region35: #{discriminator_forward.1} parent=11 // pred_region
          _
        $region36: #{discriminator_forward.1} parent=11 // pred_fallthru
          _
        // Predicated region
        $region37: #{discriminator_forward.1} parent=11 // pred_check
          %p311 = pneg %p192
        $region38: #{discriminator_forward.1} parent=11 // pred_check_branch
          %313 = sbr.rel (%p311) target = $region40
        $region39: #{discriminator_forward.1} parent=11 // pred_region
          %s315 = ssub.s32 16, 16
          %316 = vsyncadd [#allocation5], %s315
          %s318 = sshll.u32 [#allocation6], 4
          %s319 = int_to_ptr.vmem [resolvable:$true] %s318
          %321 = dma.hbm_to_vmem [thread:$0]  %s7, 16, %s319, [#allocation5]
        $region40: #{discriminator_forward.1} parent=11 // pred_fallthru
          _
        // Predicated region
        $region41: #{discriminator_forward.1} parent=11 // pred_check
          %p322 = pneg %p213
        $region42: #{discriminator_forward.1} parent=11 // pred_check_branch
          %324 = sbr.rel (%p322) target = $region44
        $region43: #{discriminator_forward.1} parent=11 // pred_region
          _
        $region44: #{discriminator_forward.1} parent=11 // pred_fallthru
          _
        // Predicated region
        $region45: #{discriminator_forward.1} parent=11 // pred_check
          %p325 = pneg %p234
        $region46: #{discriminator_forward.1} parent=11 // pred_check_branch
          %327 = sbr.rel (%p325) target = $region48
        $region47: #{discriminator_forward.1} parent=11 // pred_region
          %s329 = ssub.s32 16, 16
          %330 = vsyncadd [#allocation8], %s329
          %s332 = sshll.u32 [#allocation7], 4
          %s333 = int_to_ptr.vmem [resolvable:$true] %s332
          %335 = dma.hbm_to_vmem [thread:$0]  %s9, 16, %s333, [#allocation8]
        $region48: #{discriminator_forward.1} parent=11 // pred_fallthru
          _
      $region12: #{discriminator_forward.1} parent=5 // pred_fallthru
        _
      %p336 = scmp.lt.s32.totalorder %s19, 2
      // Predicated region
      $region49: #{discriminator_forward.1} parent=5 // pred_check
        %p337 = pneg %p336
      $region50: #{discriminator_forward.1} parent=5 // pred_check_branch
        %339 = sbr.rel (%p337) target = $region52
      $region51: #{discriminator_forward.1} parent=5 // pred_region
        // Predicated region
        $region53: #{discriminator_forward.1} parent=51 // pred_check
          %p340 = pneg %p39
        $region54: #{discriminator_forward.1} parent=51 // pred_check_branch
          %342 = sbr.rel (%p340) target = $region56
        $region55: #{discriminator_forward.1} parent=51 // pred_region
          %s343 = smul.u32 4, %s19
          %p344 = scmp.lt.s32.totalorder %s343, 7
          %s345 = scalar_select %p344, %s343, 7
          %s346 = smul.addr %s345, 4
          %s347 = scalar_lea.vmem %s0, %s346
          %s348 = smul.u32 4, %s19
        $region56: #{discriminator_forward.1} parent=51 // pred_fallthru
          _
      $region52: #{discriminator_forward.1} parent=5 // pred_fallthru
        _
      %p349 = scmp.le.s32.totalorder 1, %s19
      %p350 = scmp.lt.s32.totalorder %s19, 3
      %p351 = pnand %p349, %p350
      %p352 = pneg %p351
      // Predicated region
      $region57: #{discriminator_forward.1} parent=5 // pred_check
        _
      $region58: #{discriminator_forward.1} parent=5 // pred_check_branch
        %354 = sbr.rel (%p351) target = $region60
      $region59: #{discriminator_forward.1} parent=5 // pred_region
        %s355 = ssub.s32 %s19, 1
        // Predicated region
        $region61: #{discriminator_forward.1} parent=59 // pred_check
          %p356 = pneg %p108
        $region62: #{discriminator_forward.1} parent=59 // pred_check_branch
          %358 = sbr.rel (%p356) target = $region64
        $region63: #{discriminator_forward.1} parent=59 // pred_region
          %359 = dma.done [#allocation3], 5184
        $region64: #{discriminator_forward.1} parent=59 // pred_fallthru
          _
        // Predicated region
        $region65: #{discriminator_forward.1} parent=59 // pred_check
          %p360 = pneg %p150
        $region66: #{discriminator_forward.1} parent=59 // pred_check_branch
          %362 = sbr.rel (%p360) target = $region68
        $region67: #{discriminator_forward.1} parent=59 // pred_region
          %363 = dma.done [#allocation5], 16
        $region68: #{discriminator_forward.1} parent=59 // pred_fallthru
          _
        // Predicated region
        $region69: #{discriminator_forward.1} parent=59 // pred_check
          %p364 = pneg %p192
        $region70: #{discriminator_forward.1} parent=59 // pred_check_branch
          %366 = sbr.rel (%p364) target = $region72
        $region71: #{discriminator_forward.1} parent=59 // pred_region
          %367 = dma.done [#allocation5], 16
        $region72: #{discriminator_forward.1} parent=59 // pred_fallthru
          _
        // Predicated region
        $region73: #{discriminator_forward.1} parent=59 // pred_check
          %p368 = pneg %p234
        $region74: #{discriminator_forward.1} parent=59 // pred_check_branch
          %370 = sbr.rel (%p368) target = $region76
        $region75: #{discriminator_forward.1} parent=59 // pred_region
          %371 = dma.done [#allocation8], 16
        $region76: #{discriminator_forward.1} parent=59 // pred_fallthru
          _
        %s372 = smul.u32 4, %s24
        %p373 = scmp.lt.s32.totalorder %s372, 7
        %s374 = scalar_select %p373, %s372, 7
        %s375 = smul.addr %s374, 4
        %s376 = scalar_lea.vmem %s0, %s375
        %p377 = pneg %p45
        %p378 = pneg %p42
        %p379 = pneg %p66
        %p380 = pneg %p63
        %p381 = pneg %p87
        %p382 = pneg %p84
        %p383 = pneg %p108
        %p384 = pneg %p105
        %p385 = pneg %p129
        %p386 = pneg %p126
        %p387 = pneg %p150
        %p388 = pneg %p147
        %p389 = pneg %p171
        %p390 = pneg %p168
        %p391 = pneg %p192
        %p392 = pneg %p189
        %p393 = pneg %p213
        %p394 = pneg %p210
        %p395 = pneg %p234
        %p396 = pneg %p231
        %p397 = pneg %p260
        %p398 = pneg %p257
        %s399 = smul.u32 4, %s24
        %p400 = scmp.lt.s32.totalorder %s399, 7
        %s401 = scalar_select %p400, %s399, 7
        %s402 = smul.addr %s401, 4
        %s403 = scalar_lea.vmem %s10, %s402
        %s404 = smul.u32 4, %s24
        %p405 = scmp.lt.s32.totalorder %s404, 7
        %s406 = scalar_select %p405, %s404, 7
        %s407 = smul.addr %s406, 4
        %s408 = scalar_lea.vmem %s0, %s407
        %s409 = smul.u32 4, %s24
        %s410 = smul.u32 4, %s24
        %p411 = scmp.lt.s32.totalorder %s410, 7
        %s412 = scalar_select %p411, %s410, 7
        %s413 = smul.addr %s412, 4
        %s414 = scalar_lea.vmem %s10, %s413
        %s415 = smul.u32 4, %s24
        %v417 = vld [vmem:[%s408] sm:$0xf]
        %v418 = vld [vmem:[%s408 + $0x4] sm:$0xf]
        %v419 = vld [vmem:[%s408 + $0x8] sm:$0xf]
        %v420 = vld [vmem:[%s408 + $0xc] sm:$0xf]
        %v421 = vld [vmem:[%s1] sm:$0xff]
        %v422 = vld [vmem:[%s1 + $0x8] sm:$0xff]
        %v423 = vld [vmem:[%s1 + $0x10] sm:$0xff]
        %v424 = vld [vmem:[%s1 + $0x18] sm:$0xff]
        %v425 = vld [vmem:[%s1 + $0x20] sm:$0xff]
        %v426 = vld [vmem:[%s1 + $0x28] sm:$0xff]
        %v427 = vld [vmem:[%s1 + $0x30] sm:$0xff]
        %v428 = vld [vmem:[%s1 + $0x38] sm:$0xff]
        %v429 = vld [vmem:[%s1 + $0x40] sm:$0xff]
        %v430 = vld [vmem:[%s1 + $0x48] sm:$0xff]
        %v431 = vld [vmem:[%s1 + $0x50] sm:$0xff]
        %v432 = vld [vmem:[%s1 + $0x58] sm:$0xff]
        %v433 = vld [vmem:[%s1 + $0x60] sm:$0x33]
        %v434 = vld [vmem:[%s1 + $0x68] sm:$0x33]
        %v435 = vld [vmem:[%s1 + $0x70] sm:$0x33]
        %v440 = vunpack.c.l.b16 %v417
        %v441 = vunpack.c.l.b16 %v418
        %v442 = vunpack.c.l.b16 %v419
        %v443 = vunpack.c.l.b16 %v420
        %v444 = vpack.c.b16 %v441, %v440
        %v445 = vpack.c.b16 %v443, %v442
        %v461 = vunpack.c.l.b16 %v421
        %v462 = vunpack.c.h.b16 %v421
        %v463 = vunpack.c.l.b16 %v422
        %v464 = vunpack.c.h.b16 %v422
        %v465 = vunpack.c.l.b16 %v423
        %v466 = vunpack.c.h.b16 %v423
        %v467 = vunpack.c.l.b16 %v424
        %v468 = vunpack.c.h.b16 %v424
        %v469 = vunpack.c.l.b16 %v425
        %v470 = vunpack.c.h.b16 %v425
        %v471 = vunpack.c.l.b16 %v426
        %v472 = vunpack.c.h.b16 %v426
        %v473 = vunpack.c.l.b16 %v427
        %v474 = vunpack.c.h.b16 %v427
        %v475 = vunpack.c.l.b16 %v428
        %v476 = vunpack.c.h.b16 %v428
        %v477 = vunpack.c.l.b16 %v429
        %v478 = vunpack.c.h.b16 %v429
        %v479 = vunpack.c.l.b16 %v430
        %v480 = vunpack.c.h.b16 %v430
        %v481 = vunpack.c.l.b16 %v431
        %v482 = vunpack.c.h.b16 %v431
        %v483 = vunpack.c.l.b16 %v432
        %v484 = vunpack.c.h.b16 %v432
        %v485 = vunpack.c.l.b16 %v433
        %v486 = vunpack.c.h.b16 %v433
        %v487 = vunpack.c.l.b16 %v434
        %v488 = vunpack.c.h.b16 %v434
        %v489 = vunpack.c.l.b16 %v435
        %v490 = vunpack.c.h.b16 %v435
        %v491 = vpack.c.b16 %v467, %v461
        %v492 = vpack.c.b16 %v468, %v462
        %v493 = vpack.c.b16 %v469, %v463
        %v494 = vpack.c.b16 %v470, %v464
        %v495 = vpack.c.b16 %v471, %v465
        %v496 = vpack.c.b16 %v472, %v466
        %v497 = vpack.c.b16 %v479, %v473
        %v498 = vpack.c.b16 %v480, %v474
        %v499 = vpack.c.b16 %v481, %v475
        %v500 = vpack.c.b16 %v482, %v476
        %v501 = vpack.c.b16 %v483, %v477
        %v502 = vpack.c.b16 %v484, %v478
        %v503 = vpack.c.b16 %v485, %v485
        %v504 = vpack.c.b16 %v486, %v486
        %v505 = vpack.c.b16 %v487, %v487
        %v506 = vpack.c.b16 %v488, %v488
        %v507 = vpack.c.b16 %v489, %v489
        %v508 = vpack.c.b16 %v490, %v490
        %vm521 = vcmask 293888
        %v523 = vsel %vm521, %v444, 0
        %v526 = vsel %vm521, %v445, 0
        %vm528 = vcmask 1041408
        %v530 = vsel %vm528, %v503, 0
        %v533 = vsel %vm528, %v504, 0
        %v536 = vsel %vm528, %v505, 0
        %v539 = vsel %vm528, %v506, 0
        %v542 = vsel %vm528, %v507, 0
        %v545 = vsel %vm528, %v508, 0
        %547 = vmatprep.subr.bf16.mxu0 %v492
        %548 = vmatpush1.bf16.msra.mxu0 %v491
        %549 = vmatprep.subr.bf16.mxu0 %v498
        %550 = vmatpush1.bf16.msra.mxu0 %v497
        %551 = vmatprep.subr.bf16.mxu0 %v533
        %552 = vmatpush1.bf16.msra.mxu0 %v530
        %553 = vmatprep.subr.bf16.mxu0 0
        %554 = vmatpush1.bf16.msra.mxu0 0
        %555 = vmatprep.subr.bf16.mxu0 0
        %556 = vmatpush1.bf16.msra.mxu0 0
        %557 = vmatprep.subr.bf16.mxu0 0
        %558 = vmatpush1.bf16.msra.mxu0 0
        %559 = vmatprep.subr.bf16.mxu0 0
        %560 = vmatpush1.bf16.msra.mxu0 0
        %561 = vmatprep.subr.bf16.mxu0 0
        %562 = vmatpush1.bf16.msra.mxu0 0
        %563 = vmatprep.subr.bf16.mxu0 0
        %564 = vmatpush1.bf16.msra.mxu0 0
        %565 = vmatprep.subr.bf16.mxu0 0
        %566 = vmatpush1.bf16.msra.mxu0 0
        %567 = vmatprep.subr.bf16.mxu0 0
        %568 = vmatpush1.bf16.msra.mxu0 0
        %569 = vmatprep.subr.bf16.mxu0 0
        %570 = vmatpush1.bf16.msra.mxu0 0
        %571 = vmatprep.subr.bf16.mxu0 0
        %572 = vmatpush1.bf16.msra.mxu0 0
        %573 = vmatprep.subr.bf16.mxu0 0
        %574 = vmatpush1.bf16.msra.mxu0 0
        %575 = vmatprep.subr.bf16.mxu0 0
        %576 = vmatpush1.bf16.msra.mxu0 0
        %577 = vmatprep.subr.bf16.mxu0 0
        %578 = vmatpush1.bf16.msra.mxu0 0
        %579 = vmatprep.mubr.bf16.mxu0 0
        %580 = vmatmul.mubr.bf16.gmra.mrb[0].mxu0 %v523
        %v581 = vpop.f32.mrb[0].mxu0
        %v582 = vadd.f32 0.0, %v581
        %v583 = vpop.f32.mrb[0].mxu0
        %v584 = vadd.f32 0.0, %v583
        %v585 = vpop.f32.mrb[0].mxu0
        %v586 = vadd.f32 0.0, %v585
        %v587 = vpop.f32.mrb[0].mxu0
        %v588 = vadd.f32 0.0, %v587
        %589 = vmatprep.mubr.bf16.mxu0 0
        %590 = vmatmul.mubr.bf16.gmra.mrb[0].mxu0 %v526
        %v591 = vpop.f32.mrb[0].mxu0
        %v592 = vadd.f32 0.0, %v591
        %v593 = vpop.f32.mrb[0].mxu0
        %v594 = vadd.f32 0.0, %v593
        %v595 = vpop.f32.mrb[0].mxu0
        %v596 = vadd.f32 0.0, %v595
        %v597 = vpop.f32.mrb[0].mxu0
        %v598 = vadd.f32 0.0, %v597
        %599 = vdwg.mxu0
        %600 = vmatprep.subr.bf16.mxu0 %v494
        %601 = vmatpush1.bf16.msra.mxu0 %v493
        %602 = vmatprep.subr.bf16.mxu0 %v500
        %603 = vmatpush1.bf16.msra.mxu0 %v499
        %604 = vmatprep.subr.bf16.mxu0 %v539
        %605 = vmatpush1.bf16.msra.mxu0 %v536
        %606 = vmatprep.subr.bf16.mxu0 0
        %607 = vmatpush1.bf16.msra.mxu0 0
        %608 = vmatprep.subr.bf16.mxu0 0
        %609 = vmatpush1.bf16.msra.mxu0 0
        %610 = vmatprep.subr.bf16.mxu0 0
        %611 = vmatpush1.bf16.msra.mxu0 0
        %612 = vmatprep.subr.bf16.mxu0 0
        %613 = vmatpush1.bf16.msra.mxu0 0
        %614 = vmatprep.subr.bf16.mxu0 0
        %615 = vmatpush1.bf16.msra.mxu0 0
        %616 = vmatprep.subr.bf16.mxu0 0
        %617 = vmatpush1.bf16.msra.mxu0 0
        %618 = vmatprep.subr.bf16.mxu0 0
        %619 = vmatpush1.bf16.msra.mxu0 0
        %620 = vmatprep.subr.bf16.mxu0 0
        %621 = vmatpush1.bf16.msra.mxu0 0
        %622 = vmatprep.subr.bf16.mxu0 0
        %623 = vmatpush1.bf16.msra.mxu0 0
        %624 = vmatprep.subr.bf16.mxu0 0
        %625 = vmatpush1.bf16.msra.mxu0 0
        %626 = vmatprep.subr.bf16.mxu0 0
        %627 = vmatpush1.bf16.msra.mxu0 0
        %628 = vmatprep.subr.bf16.mxu0 0
        %629 = vmatpush1.bf16.msra.mxu0 0
        %630 = vmatprep.subr.bf16.mxu0 0
        %631 = vmatpush1.bf16.msra.mxu0 0
        %632 = vmatprep.mubr.bf16.mxu0 0
        %633 = vmatmul.mubr.bf16.gmra.mrb[0].mxu0 %v523
        %v634 = vpop.f32.mrb[0].mxu0
        %v635 = vadd.f32 0.0, %v634
        %v636 = vpop.f32.mrb[0].mxu0
        %v637 = vadd.f32 0.0, %v636
        %v638 = vpop.f32.mrb[0].mxu0
        %v639 = vadd.f32 0.0, %v638
        %v640 = vpop.f32.mrb[0].mxu0
        %v641 = vadd.f32 0.0, %v640
        %642 = vmatprep.mubr.bf16.mxu0 0
        %643 = vmatmul.mubr.bf16.gmra.mrb[0].mxu0 %v526
        %v644 = vpop.f32.mrb[0].mxu0
        %v645 = vadd.f32 0.0, %v644
        %v646 = vpop.f32.mrb[0].mxu0
        %v647 = vadd.f32 0.0, %v646
        %v648 = vpop.f32.mrb[0].mxu0
        %v649 = vadd.f32 0.0, %v648
        %v650 = vpop.f32.mrb[0].mxu0
        %v651 = vadd.f32 0.0, %v650
        %652 = vdwg.mxu0
        %653 = vmatprep.subr.bf16.mxu0 %v496
        %654 = vmatpush1.bf16.msra.mxu0 %v495
        %655 = vmatprep.subr.bf16.mxu0 %v502
        %656 = vmatpush1.bf16.msra.mxu0 %v501
        %657 = vmatprep.subr.bf16.mxu0 %v545
        %658 = vmatpush1.bf16.msra.mxu0 %v542
        %659 = vmatprep.subr.bf16.mxu0 0
        %660 = vmatpush1.bf16.msra.mxu0 0
        %661 = vmatprep.subr.bf16.mxu0 0
        %662 = vmatpush1.bf16.msra.mxu0 0
        %663 = vmatprep.subr.bf16.mxu0 0
        %664 = vmatpush1.bf16.msra.mxu0 0
        %665 = vmatprep.subr.bf16.mxu0 0
        %666 = vmatpush1.bf16.msra.mxu0 0
        %667 = vmatprep.subr.bf16.mxu0 0
        %668 = vmatpush1.bf16.msra.mxu0 0
        %669 = vmatprep.subr.bf16.mxu0 0
        %670 = vmatpush1.bf16.msra.mxu0 0
        %671 = vmatprep.subr.bf16.mxu0 0
        %672 = vmatpush1.bf16.msra.mxu0 0
        %673 = vmatprep.subr.bf16.mxu0 0
        %674 = vmatpush1.bf16.msra.mxu0 0
        %675 = vmatprep.subr.bf16.mxu0 0
        %676 = vmatpush1.bf16.msra.mxu0 0
        %677 = vmatprep.subr.bf16.mxu0 0
        %678 = vmatpush1.bf16.msra.mxu0 0
        %679 = vmatprep.subr.bf16.mxu0 0
        %680 = vmatpush1.bf16.msra.mxu0 0
        %681 = vmatprep.subr.bf16.mxu0 0
        %682 = vmatpush1.bf16.msra.mxu0 0
        %683 = vmatprep.subr.bf16.mxu0 0
        %684 = vmatpush1.bf16.msra.mxu0 0
        %685 = vmatprep.mubr.bf16.mxu0 0
        %686 = vmatmul.mubr.bf16.gmra.mrb[0].mxu0 %v523
        %v687 = vpop.f32.mrb[0].mxu0
        %v688 = vadd.f32 0.0, %v687
        %v689 = vpop.f32.mrb[0].mxu0
        %v690 = vadd.f32 0.0, %v689
        %v691 = vpop.f32.mrb[0].mxu0
        %v692 = vadd.f32 0.0, %v691
        %v693 = vpop.f32.mrb[0].mxu0
        %v694 = vadd.f32 0.0, %v693
        %695 = vmatprep.mubr.bf16.mxu0 0
        %696 = vmatmul.mubr.bf16.gmra.mrb[0].mxu0 %v526
        %v697 = vpop.f32.mrb[0].mxu0
        %v698 = vadd.f32 0.0, %v697
        %v699 = vpop.f32.mrb[0].mxu0
        %v700 = vadd.f32 0.0, %v699
        %v701 = vpop.f32.mrb[0].mxu0
        %v702 = vadd.f32 0.0, %v701
        %v703 = vpop.f32.mrb[0].mxu0
        %v704 = vadd.f32 0.0, %v703
        %705 = vdwg.mxu0
        %v706 = vld [vmem:[%s2] sm:$0x3f]
        %v708 = vlaneseq
        %v709 = vshrl.u32 %v708, 7
        %v710 = vsub.s32 0, %v709
        %v711 = vrot.slane %v706, %v710
        %v712 = vlaneseq
        %v713 = vshrl.u32 %v712, 7
        %v714 = vsub.s32 1, %v713
        %v715 = vrot.slane %v706, %v714
        %v716 = vlaneseq
        %v717 = vshrl.u32 %v716, 7
        %v718 = vsub.s32 2, %v717
        %v719 = vrot.slane %v706, %v718
        %v720 = vlaneseq
        %v721 = vshrl.u32 %v720, 7
        %v722 = vsub.s32 3, %v721
        %v723 = vrot.slane %v706, %v722
        %v724 = vlaneseq
        %v725 = vshrl.u32 %v724, 7
        %v726 = vsub.s32 4, %v725
        %v727 = vrot.slane %v706, %v726
        %v728 = vlaneseq
        %v729 = vshrl.u32 %v728, 7
        %v730 = vsub.s32 5, %v729
        %v731 = vrot.slane %v706, %v730
        %vm738 = vcmp.eq.f32.partialorder %v582, %v711
        %vm739 = vcmp.eq.f32.partialorder %v584, %v715
        %vm740 = vcmp.eq.f32.partialorder %v635, %v719
        %vm741 = vcmp.eq.f32.partialorder %v637, %v723
        %vm742 = vcmp.eq.f32.partialorder %v688, %v727
        %vm743 = vcmp.eq.f32.partialorder %v690, %v731
        %vm744 = vcmp.eq.f32.partialorder %v586, %v711
        %vm745 = vcmp.eq.f32.partialorder %v588, %v715
        %vm746 = vcmp.eq.f32.partialorder %v639, %v719
        %vm747 = vcmp.eq.f32.partialorder %v641, %v723
        %vm748 = vcmp.eq.f32.partialorder %v692, %v727
        %vm749 = vcmp.eq.f32.partialorder %v694, %v731
        %vm750 = vcmp.eq.f32.partialorder %v592, %v711
        %vm751 = vcmp.eq.f32.partialorder %v594, %v715
        %vm752 = vcmp.eq.f32.partialorder %v645, %v719
        %vm753 = vcmp.eq.f32.partialorder %v647, %v723
        %vm754 = vcmp.eq.f32.partialorder %v698, %v727
        %vm755 = vcmp.eq.f32.partialorder %v700, %v731
        %vm756 = vcmp.eq.f32.partialorder %v596, %v711
        %vm757 = vcmp.eq.f32.partialorder %v598, %v715
        %vm758 = vcmp.eq.f32.partialorder %v649, %v719
        %vm759 = vcmp.eq.f32.partialorder %v651, %v723
        %vm760 = vcmp.eq.f32.partialorder %v702, %v727
        %vm761 = vcmp.eq.f32.partialorder %v704, %v731
        %v762 = vsel %vm738, 1, 0
        %v763 = vsel %vm739, 1, 0
        %v764 = vsel %vm740, 1, 0
        %v765 = vsel %vm741, 1, 0
        %v766 = vsel %vm742, 1, 0
        %v767 = vsel %vm743, 1, 0
        %v768 = vsel %vm744, 1, 0
        %v769 = vsel %vm745, 1, 0
        %v770 = vsel %vm746, 1, 0
        %v771 = vsel %vm747, 1, 0
        %v772 = vsel %vm748, 1, 0
        %v773 = vsel %vm749, 1, 0
        %v774 = vsel %vm750, 1, 0
        %v775 = vsel %vm751, 1, 0
        %v776 = vsel %vm752, 1, 0
        %v777 = vsel %vm753, 1, 0
        %v778 = vsel %vm754, 1, 0
        %v779 = vsel %vm755, 1, 0
        %v780 = vsel %vm756, 1, 0
        %v781 = vsel %vm757, 1, 0
        %v782 = vsel %vm758, 1, 0
        %v783 = vsel %vm759, 1, 0
        %v784 = vsel %vm760, 1, 0
        %v785 = vsel %vm761, 1, 0
        %v786 = vcvt.s32.f32 %v762
        %v787 = vcvt.s32.f32 %v763
        %v788 = vcvt.s32.f32 %v764
        %v789 = vcvt.s32.f32 %v765
        %v790 = vcvt.s32.f32 %v766
        %v791 = vcvt.s32.f32 %v767
        %v792 = vcvt.s32.f32 %v768
        %v793 = vcvt.s32.f32 %v769
        %v794 = vcvt.s32.f32 %v770
        %v795 = vcvt.s32.f32 %v771
        %v796 = vcvt.s32.f32 %v772
        %v797 = vcvt.s32.f32 %v773
        %v798 = vcvt.s32.f32 %v774
        %v799 = vcvt.s32.f32 %v775
        %v800 = vcvt.s32.f32 %v776
        %v801 = vcvt.s32.f32 %v777
        %v802 = vcvt.s32.f32 %v778
        %v803 = vcvt.s32.f32 %v779
        %v804 = vcvt.s32.f32 %v780
        %v805 = vcvt.s32.f32 %v781
        %v806 = vcvt.s32.f32 %v782
        %v807 = vcvt.s32.f32 %v783
        %v808 = vcvt.s32.f32 %v784
        %v809 = vcvt.s32.f32 %v785
        %v810 = vpack.c.bf16 %v792, %v786
        %v811 = vpack.c.bf16 %v793, %v787
        %v812 = vpack.c.bf16 %v794, %v788
        %v813 = vpack.c.bf16 %v795, %v789
        %v814 = vpack.c.bf16 %v796, %v790
        %v815 = vpack.c.bf16 %v797, %v791
        %v816 = vpack.c.bf16 %v804, %v798
        %v817 = vpack.c.bf16 %v805, %v799
        %v818 = vpack.c.bf16 %v806, %v800
        %v819 = vpack.c.bf16 %v807, %v801
        %v820 = vpack.c.bf16 %v808, %v802
        %v821 = vpack.c.bf16 %v809, %v803
        %v822 = vld [vmem:[#allocation2] sm:$0xf]
        %v823 = vld [vmem:[#allocation2 + $0x4] sm:$0xf]
        %v824 = vld [vmem:[#allocation2 + $0x8] sm:$0xf]
        %v825 = vld [vmem:[#allocation2 + $0xc] sm:$0xf]
        %v826 = vld [vmem:[#allocation2 + $0x10] sm:$0xf]
        %v827 = vld [vmem:[#allocation2 + $0x14] sm:$0xf]
        %v828 = vld [vmem:[#allocation2 + $0x18] sm:$0xf]
        %v829 = vld [vmem:[#allocation2 + $0x1c] sm:$0xf]
        %v830 = vld [vmem:[#allocation2 + $0x20] sm:$0xf]
        %v831 = vld [vmem:[#allocation2 + $0x24] sm:$0xf]
        %v832 = vld [vmem:[#allocation2 + $0x28] sm:$0xf]
        %v833 = vld [vmem:[#allocation2 + $0x2c] sm:$0xf]
        %v834 = vld [vmem:[#allocation2 + $0x30] sm:$0xf]
        %v835 = vld [vmem:[#allocation2 + $0x34] sm:$0xf]
        %v836 = vld [vmem:[#allocation2 + $0x38] sm:$0xf]
        %v837 = vld [vmem:[#allocation2 + $0x3c] sm:$0xf]
        %v838 = vld [vmem:[#allocation2 + $0x40] sm:$0xf]
        %v839 = vld [vmem:[#allocation2 + $0x44] sm:$0xf]
        %v840 = vld [vmem:[#allocation2 + $0x48] sm:$0xf]
        %v841 = vld [vmem:[#allocation2 + $0x4c] sm:$0xf]
        %v842 = vld [vmem:[#allocation2 + $0x50] sm:$0xf]
        %v843 = vld [vmem:[#allocation2 + $0x54] sm:$0xf]
        %v844 = vld [vmem:[#allocation2 + $0x58] sm:$0xf]
        %v845 = vld [vmem:[#allocation2 + $0x5c] sm:$0xf]
        %v846 = vld [vmem:[#allocation2 + $0x60] sm:$0xf]
        %v847 = vld [vmem:[#allocation2 + $0x64] sm:$0xf]
        %v848 = vld [vmem:[#allocation2 + $0x68] sm:$0xf]
        %v849 = vld [vmem:[#allocation2 + $0x6c] sm:$0xf]
        %v850 = vld [vmem:[#allocation2 + $0x70] sm:$0xf]
        %v851 = vld [vmem:[#allocation2 + $0x74] sm:$0xf]
        %v852 = vld [vmem:[#allocation2 + $0x78] sm:$0xf]
        %v853 = vld [vmem:[#allocation2 + $0x7c] sm:$0xf]
        %v854 = vld [vmem:[#allocation2 + $0x80] sm:$0xf]
        %v855 = vld [vmem:[#allocation2 + $0x84] sm:$0xf]
        %v856 = vld [vmem:[#allocation2 + $0x88] sm:$0xf]
        %v857 = vld [vmem:[#allocation2 + $0x8c] sm:$0xf]
        %v858 = vld [vmem:[#allocation2 + $0x90] sm:$0xf]
        %v859 = vld [vmem:[#allocation2 + $0x94] sm:$0xf]
        %v860 = vld [vmem:[#allocation2 + $0x98] sm:$0xf]
        %v861 = vld [vmem:[#allocation2 + $0x9c] sm:$0xf]
        %v862 = vld [vmem:[#allocation2 + $0xa0] sm:$0xf]
        %v863 = vld [vmem:[#allocation2 + $0xa4] sm:$0xf]
        %v864 = vld [vmem:[#allocation2 + $0xa8] sm:$0xf]
        %v865 = vld [vmem:[#allocation2 + $0xac] sm:$0xf]
        %v866 = vld [vmem:[#allocation2 + $0xb0] sm:$0xf]
        %v867 = vld [vmem:[#allocation2 + $0xb4] sm:$0xf]
        %v868 = vld [vmem:[#allocation2 + $0xb8] sm:$0xf]
        %v869 = vld [vmem:[#allocation2 + $0xbc] sm:$0xf]
        %v870 = vld [vmem:[#allocation2 + $0xc0] sm:$0xf]
        %v871 = vld [vmem:[#allocation2 + $0xc4] sm:$0xf]
        %v872 = vld [vmem:[#allocation2 + $0xc8] sm:$0xf]
        %v873 = vld [vmem:[#allocation2 + $0xcc] sm:$0xf]
        %v874 = vld [vmem:[#allocation2 + $0xd0] sm:$0xf]
        %v875 = vld [vmem:[#allocation2 + $0xd4] sm:$0xf]
        %v876 = vld [vmem:[#allocation2 + $0xd8] sm:$0xf]
        %v877 = vld [vmem:[#allocation2 + $0xdc] sm:$0xf]
        %v878 = vld [vmem:[#allocation2 + $0xe0] sm:$0xf]
        %v879 = vld [vmem:[#allocation2 + $0xe4] sm:$0xf]
        %v880 = vld [vmem:[#allocation2 + $0xe8] sm:$0xf]
        %v881 = vld [vmem:[#allocation2 + $0xec] sm:$0xf]
        %v882 = vld [vmem:[#allocation2 + $0xf0] sm:$0xf]
        %v883 = vld [vmem:[#allocation2 + $0xf4] sm:$0xf]
        %v884 = vld [vmem:[#allocation2 + $0xf8] sm:$0xf]
        %v885 = vld [vmem:[#allocation2 + $0xfc] sm:$0xf]
        %v886 = vld [vmem:[#allocation2 + $0x100] sm:$0xf]
        %v887 = vld [vmem:[#allocation2 + $0x104] sm:$0xf]
        %v888 = vld [vmem:[#allocation2 + $0x108] sm:$0xf]
        %v889 = vld [vmem:[#allocation2 + $0x10c] sm:$0xf]
        %v890 = vld [vmem:[#allocation2 + $0x110] sm:$0xf]
        %v891 = vld [vmem:[#allocation2 + $0x114] sm:$0xf]
        %v892 = vld [vmem:[#allocation2 + $0x118] sm:$0xf]
        %v893 = vld [vmem:[#allocation2 + $0x11c] sm:$0xf]
        %v894 = vld [vmem:[#allocation2 + $0x120] sm:$0xf]
        %v895 = vld [vmem:[#allocation2 + $0x124] sm:$0xf]
        %v896 = vld [vmem:[#allocation2 + $0x128] sm:$0xf]
        %v897 = vld [vmem:[#allocation2 + $0x12c] sm:$0xf]
        %v898 = vld [vmem:[#allocation2 + $0x130] sm:$0xf]
        %v899 = vld [vmem:[#allocation2 + $0x134] sm:$0xf]
        %v900 = vld [vmem:[#allocation2 + $0x138] sm:$0xf]
        %v901 = vld [vmem:[#allocation2 + $0x13c] sm:$0xf]
        %v902 = vld [vmem:[#allocation2 + $0x140] sm:$0xf]
        %v903 = vld [vmem:[%s4] sm:$0xf]
        %v904 = vld [vmem:[%s4 + $0x4] sm:$0xf]
        %v905 = vld [vmem:[%s4 + $0x8] sm:$0xf]
        %v906 = vld [vmem:[%s4 + $0xc] sm:$0xf]
        %v907 = vld [vmem:[%s4 + $0x10] sm:$0x3]
        %v913 = vunpack.c.l.b16 %v903
        %v914 = vunpack.c.l.b16 %v904
        %v915 = vunpack.c.l.b16 %v905
        %v916 = vunpack.c.l.b16 %v906
        %v917 = vunpack.c.l.b16 %v907
        %v918 = vpack.c.b16 %v914, %v913
        %v919 = vpack.c.b16 %v916, %v915
        %v920 = vpack.c.b16 %v917, %v917
        %v924 = vsel %vm528, %v920, 0
        %926 = vmatprep.subr.bf16.mxu0 0
        %927 = vmatpush1.bf16.msra.mxu0 %v918
        %928 = vmatprep.subr.bf16.mxu0 0
        %929 = vmatpush1.bf16.msra.mxu0 %v919
        %930 = vmatprep.subr.bf16.mxu0 0
        %931 = vmatpush1.bf16.msra.mxu0 %v924
        %932 = vmatprep.subr.bf16.mxu0 0
        %933 = vmatpush1.bf16.msra.mxu0 0
        %934 = vmatprep.subr.bf16.mxu0 0
        %935 = vmatpush1.bf16.msra.mxu0 0
        %936 = vmatprep.subr.bf16.mxu0 0
        %937 = vmatpush1.bf16.msra.mxu0 0
        %938 = vmatprep.subr.bf16.mxu0 0
        %939 = vmatpush1.bf16.msra.mxu0 0
        %940 = vmatprep.subr.bf16.mxu0 0
        %941 = vmatpush1.bf16.msra.mxu0 0
        %942 = vmatprep.subr.bf16.mxu0 0
        %943 = vmatpush1.bf16.msra.mxu0 0
        %944 = vmatprep.subr.bf16.mxu0 0
        %945 = vmatpush1.bf16.msra.mxu0 0
        %946 = vmatprep.subr.bf16.mxu0 0
        %947 = vmatpush1.bf16.msra.mxu0 0
        %948 = vmatprep.subr.bf16.mxu0 0
        %949 = vmatpush1.bf16.msra.mxu0 0
        %950 = vmatprep.subr.bf16.mxu0 0
        %951 = vmatpush1.bf16.msra.mxu0 0
        %952 = vmatprep.subr.bf16.mxu0 0
        %953 = vmatpush1.bf16.msra.mxu0 0
        %954 = vmatprep.subr.bf16.mxu0 0
        %955 = vmatpush1.bf16.msra.mxu0 0
        %956 = vmatprep.subr.bf16.mxu0 0
        %957 = vmatpush1.bf16.msra.mxu0 0
        %958 = vmatprep.mubr.bf16.mxu0 0
        %959 = vmatmul.mubr.bf16.gmra.mrb[0].mxu0 %v523
        %v960 = vpop.f32.mrb[0].mxu0
        %v961 = vadd.f32 0.0, %v960
        %v962 = vpop.f32.mrb[0].mxu0
        %v963 = vpop.f32.mrb[0].mxu0
        %v964 = vadd.f32 0.0, %v963
        %v965 = vpop.f32.mrb[0].mxu0
        %966 = vmatprep.mubr.bf16.mxu0 0
        %967 = vmatmul.mubr.bf16.gmra.mrb[0].mxu0 %v526
        %v968 = vpop.f32.mrb[0].mxu0
        %v969 = vadd.f32 0.0, %v968
        %v970 = vpop.f32.mrb[0].mxu0
        %v971 = vpop.f32.mrb[0].mxu0
        %v972 = vadd.f32 0.0, %v971
        %v973 = vpop.f32.mrb[0].mxu0
        %974 = vdwg.mxu0
        %v1056 = vunpack.c.l.b16 %v822
        %v1057 = vunpack.c.l.b16 %v823
        %v1058 = vunpack.c.l.b16 %v824
        %v1059 = vunpack.c.l.b16 %v825
        %v1060 = vunpack.c.l.b16 %v826
        %v1061 = vunpack.c.l.b16 %v827
        %v1062 = vunpack.c.l.b16 %v828
        %v1063 = vunpack.c.l.b16 %v829
        %v1064 = vunpack.c.l.b16 %v830
        %v1065 = vunpack.c.l.b16 %v831
        %v1066 = vunpack.c.l.b16 %v832
        %v1067 = vunpack.c.l.b16 %v833
        %v1068 = vunpack.c.l.b16 %v834
        %v1069 = vunpack.c.l.b16 %v835
        %v1070 = vunpack.c.l.b16 %v836
        %v1071 = vunpack.c.l.b16 %v837
        %v1072 = vunpack.c.l.b16 %v838
        %v1073 = vunpack.c.l.b16 %v839
        %v1074 = vunpack.c.l.b16 %v840
        %v1075 = vunpack.c.l.b16 %v841
        %v1076 = vunpack.c.l.b16 %v842
        %v1077 = vunpack.c.l.b16 %v843
        %v1078 = vunpack.c.l.b16 %v844
        %v1079 = vunpack.c.l.b16 %v845
        %v1080 = vunpack.c.l.b16 %v846
        %v1081 = vunpack.c.l.b16 %v847
        %v1082 = vunpack.c.l.b16 %v848
        %v1083 = vunpack.c.l.b16 %v849
        %v1084 = vunpack.c.l.b16 %v850
        %v1085 = vunpack.c.l.b16 %v851
        %v1086 = vunpack.c.l.b16 %v852
        %v1087 = vunpack.c.l.b16 %v853
        %v1088 = vunpack.c.l.b16 %v854
        %v1089 = vunpack.c.l.b16 %v855
        %v1090 = vunpack.c.l.b16 %v856
        %v1091 = vunpack.c.l.b16 %v857
        %v1092 = vunpack.c.l.b16 %v858
        %v1093 = vunpack.c.l.b16 %v859
        %v1094 = vunpack.c.l.b16 %v860
        %v1095 = vunpack.c.l.b16 %v861
        %v1096 = vunpack.c.l.b16 %v862
        %v1097 = vunpack.c.l.b16 %v863
        %v1098 = vunpack.c.l.b16 %v864
        %v1099 = vunpack.c.l.b16 %v865
        %v1100 = vunpack.c.l.b16 %v866
        %v1101 = vunpack.c.l.b16 %v867
        %v1102 = vunpack.c.l.b16 %v868
        %v1103 = vunpack.c.l.b16 %v869
        %v1104 = vunpack.c.l.b16 %v870
        %v1105 = vunpack.c.l.b16 %v871
        %v1106 = vunpack.c.l.b16 %v872
        %v1107 = vunpack.c.l.b16 %v873
        %v1108 = vunpack.c.l.b16 %v874
        %v1109 = vunpack.c.l.b16 %v875
        %v1110 = vunpack.c.l.b16 %v876
        %v1111 = vunpack.c.l.b16 %v877
        %v1112 = vunpack.c.l.b16 %v878
        %v1113 = vunpack.c.l.b16 %v879
        %v1114 = vunpack.c.l.b16 %v880
        %v1115 = vunpack.c.l.b16 %v881
        %v1116 = vunpack.c.l.b16 %v882
        %v1117 = vunpack.c.l.b16 %v883
        %v1118 = vunpack.c.l.b16 %v884
        %v1119 = vunpack.c.l.b16 %v885
        %v1120 = vunpack.c.l.b16 %v886
        %v1121 = vunpack.c.l.b16 %v887
        %v1122 = vunpack.c.l.b16 %v888
        %v1123 = vunpack.c.l.b16 %v889
        %v1124 = vunpack.c.l.b16 %v890
        %v1125 = vunpack.c.l.b16 %v891
        %v1126 = vunpack.c.l.b16 %v892
        %v1127 = vunpack.c.l.b16 %v893
        %v1128 = vunpack.c.l.b16 %v894
        %v1129 = vunpack.c.l.b16 %v895
        %v1130 = vunpack.c.l.b16 %v896
        %v1131 = vunpack.c.l.b16 %v897
        %v1132 = vunpack.c.l.b16 %v898
        %v1133 = vunpack.c.l.b16 %v899
        %v1134 = vunpack.c.l.b16 %v900
        %v1135 = vunpack.c.l.b16 %v901
        %v1136 = vunpack.c.l.b16 %v902
        %v1137 = vpack.c.b16 %v1057, %v1056
        %v1138 = vpack.c.b16 %v1059, %v1058
        %v1139 = vpack.c.b16 %v1061, %v1060
        %v1140 = vpack.c.b16 %v1063, %v1062
        %v1141 = vpack.c.b16 %v1065, %v1064
        %v1142 = vpack.c.b16 %v1067, %v1066
        %v1143 = vpack.c.b16 %v1069, %v1068
        %v1144 = vpack.c.b16 %v1071, %v1070
        %v1145 = vpack.c.b16 %v1073, %v1072
        %v1146 = vpack.c.b16 %v1075, %v1074
        %v1147 = vpack.c.b16 %v1077, %v1076
        %v1148 = vpack.c.b16 %v1079, %v1078
        %v1149 = vpack.c.b16 %v1081, %v1080
        %v1150 = vpack.c.b16 %v1083, %v1082
        %v1151 = vpack.c.b16 %v1085, %v1084
        %v1152 = vpack.c.b16 %v1087, %v1086
        %v1153 = vpack.c.b16 %v1089, %v1088
        %v1154 = vpack.c.b16 %v1091, %v1090
        %v1155 = vpack.c.b16 %v1093, %v1092
        %v1156 = vpack.c.b16 %v1095, %v1094
        %v1157 = vpack.c.b16 %v1097, %v1096
        %v1158 = vpack.c.b16 %v1099, %v1098
        %v1159 = vpack.c.b16 %v1101, %v1100
        %v1160 = vpack.c.b16 %v1103, %v1102
        %v1161 = vpack.c.b16 %v1105, %v1104
        %v1162 = vpack.c.b16 %v1107, %v1106
        %v1163 = vpack.c.b16 %v1109, %v1108
        %v1164 = vpack.c.b16 %v1111, %v1110
        %v1165 = vpack.c.b16 %v1113, %v1112
        %v1166 = vpack.c.b16 %v1115, %v1114
        %v1167 = vpack.c.b16 %v1117, %v1116
        %v1168 = vpack.c.b16 %v1119, %v1118
        %v1169 = vpack.c.b16 %v1121, %v1120
        %v1170 = vpack.c.b16 %v1123, %v1122
        %v1171 = vpack.c.b16 %v1125, %v1124
        %v1172 = vpack.c.b16 %v1127, %v1126
        %v1173 = vpack.c.b16 %v1129, %v1128
        %v1174 = vpack.c.b16 %v1131, %v1130
        %v1175 = vpack.c.b16 %v1133, %v1132
        %v1176 = vpack.c.b16 %v1135, %v1134
        %v1177 = vpack.c.b16 %v1136, %v1136
        %vm1218 = vcmask 64512
        %v1220 = vsel %vm1218, %v815, 0
        %v1223 = vsel %vm1218, %v821, 0
        %vm1225 = vcmask 1043456
        %v1227 = vsel %vm1225, %v1177, 0
        %1229 = vmatprep.subr.bf16.mxu0 0
        %1230 = vmatpush1.bf16.msra.mxu0 %v1137
        %1231 = vmatprep.subr.bf16.mxu0 0
        %1232 = vmatpush1.bf16.msra.mxu0 %v1138
        %1233 = vmatprep.subr.bf16.mxu0 0
        %1234 = vmatpush1.bf16.msra.mxu0 %v1139
        %1235 = vmatprep.subr.bf16.mxu0 0
        %1236 = vmatpush1.bf16.msra.mxu0 %v1140
        %1237 = vmatprep.subr.bf16.mxu0 0
        %1238 = vmatpush1.bf16.msra.mxu0 %v1141
        %1239 = vmatprep.subr.bf16.mxu0 0
        %1240 = vmatpush1.bf16.msra.mxu0 %v1142
        %1241 = vmatprep.subr.bf16.mxu0 0
        %1242 = vmatpush1.bf16.msra.mxu0 %v1143
        %1243 = vmatprep.subr.bf16.mxu0 0
        %1244 = vmatpush1.bf16.msra.mxu0 %v1144
        %1245 = vmatprep.subr.bf16.mxu0 0
        %1246 = vmatpush1.bf16.msra.mxu0 %v1145
        %1247 = vmatprep.subr.bf16.mxu0 0
        %1248 = vmatpush1.bf16.msra.mxu0 %v1146
        %1249 = vmatprep.subr.bf16.mxu0 0
        %1250 = vmatpush1.bf16.msra.mxu0 %v1147
        %1251 = vmatprep.subr.bf16.mxu0 0
        %1252 = vmatpush1.bf16.msra.mxu0 %v1148
        %1253 = vmatprep.subr.bf16.mxu0 0
        %1254 = vmatpush1.bf16.msra.mxu0 %v1149
        %1255 = vmatprep.subr.bf16.mxu0 0
        %1256 = vmatpush1.bf16.msra.mxu0 %v1150
        %1257 = vmatprep.subr.bf16.mxu0 0
        %1258 = vmatpush1.bf16.msra.mxu0 %v1151
        %1259 = vmatprep.subr.bf16.mxu0 0
        %1260 = vmatpush1.bf16.msra.mxu0 %v1152
        %1261 = vmatprep.mubr.bf16.mxu0 %v811
        %1262 = vmatmul.mubr.bf16.gmra.mrb[0].mxu0 %v810
        %v1263 = vpop.f32.mrb[0].mxu0
        %v1264 = vadd.f32 %v961, %v1263
        %v1265 = vpop.f32.mrb[0].mxu0
        %v1266 = vpop.f32.mrb[0].mxu0
        %v1267 = vadd.f32 %v964, %v1266
        %v1268 = vpop.f32.mrb[0].mxu0
        %1269 = vmatprep.mubr.bf16.mxu0 %v817
        %1270 = vmatmul.mubr.bf16.gmra.mrb[0].mxu0 %v816
        %v1271 = vpop.f32.mrb[0].mxu0
        %v1272 = vadd.f32 %v969, %v1271
        %v1273 = vpop.f32.mrb[0].mxu0
        %v1274 = vpop.f32.mrb[0].mxu0
        %v1275 = vadd.f32 %v972, %v1274
        %v1276 = vpop.f32.mrb[0].mxu0
        %1277 = vdwg.mxu0
        %1278 = vmatprep.subr.bf16.mxu0 0
        %1279 = vmatpush1.bf16.msra.mxu0 %v1153
        %1280 = vmatprep.subr.bf16.mxu0 0
        %1281 = vmatpush1.bf16.msra.mxu0 %v1154
        %1282 = vmatprep.subr.bf16.mxu0 0
        %1283 = vmatpush1.bf16.msra.mxu0 %v1155
        %1284 = vmatprep.subr.bf16.mxu0 0
        %1285 = vmatpush1.bf16.msra.mxu0 %v1156
        %1286 = vmatprep.subr.bf16.mxu0 0
        %1287 = vmatpush1.bf16.msra.mxu0 %v1157
        %1288 = vmatprep.subr.bf16.mxu0 0
        %1289 = vmatpush1.bf16.msra.mxu0 %v1158
        %1290 = vmatprep.subr.bf16.mxu0 0
        %1291 = vmatpush1.bf16.msra.mxu0 %v1159
        %1292 = vmatprep.subr.bf16.mxu0 0
        %1293 = vmatpush1.bf16.msra.mxu0 %v1160
        %1294 = vmatprep.subr.bf16.mxu0 0
        %1295 = vmatpush1.bf16.msra.mxu0 %v1161
        %1296 = vmatprep.subr.bf16.mxu0 0
        %1297 = vmatpush1.bf16.msra.mxu0 %v1162
        %1298 = vmatprep.subr.bf16.mxu0 0
        %1299 = vmatpush1.bf16.msra.mxu0 %v1163
        %1300 = vmatprep.subr.bf16.mxu0 0
        %1301 = vmatpush1.bf16.msra.mxu0 %v1164
        %1302 = vmatprep.subr.bf16.mxu0 0
        %1303 = vmatpush1.bf16.msra.mxu0 %v1165
        %1304 = vmatprep.subr.bf16.mxu0 0
        %1305 = vmatpush1.bf16.msra.mxu0 %v1166
        %1306 = vmatprep.subr.bf16.mxu0 0
        %1307 = vmatpush1.bf16.msra.mxu0 %v1167
        %1308 = vmatprep.subr.bf16.mxu0 0
        %1309 = vmatpush1.bf16.msra.mxu0 %v1168
        %1310 = vmatprep.mubr.bf16.mxu0 %v813
        %1311 = vmatmul.mubr.bf16.gmra.mrb[0].mxu0 %v812
        %v1312 = vpop.f32.mrb[0].mxu0
        %v1313 = vadd.f32 %v1264, %v1312
        %v1314 = vpop.f32.mrb[0].mxu0
        %v1315 = vpop.f32.mrb[0].mxu0
        %v1316 = vadd.f32 %v1267, %v1315
        %v1317 = vpop.f32.mrb[0].mxu0
        %1318 = vmatprep.mubr.bf16.mxu0 %v819
        %1319 = vmatmul.mubr.bf16.gmra.mrb[0].mxu0 %v818
        %v1320 = vpop.f32.mrb[0].mxu0
        %v1321 = vadd.f32 %v1272, %v1320
        %v1322 = vpop.f32.mrb[0].mxu0
        %v1323 = vpop.f32.mrb[0].mxu0
        %v1324 = vadd.f32 %v1275, %v1323
        %v1325 = vpop.f32.mrb[0].mxu0
        %1326 = vdwg.mxu0
        %1327 = vmatprep.subr.bf16.mxu0 0
        %1328 = vmatpush1.bf16.msra.mxu0 %v1169
        %1329 = vmatprep.subr.bf16.mxu0 0
        %1330 = vmatpush1.bf16.msra.mxu0 %v1170
        %1331 = vmatprep.subr.bf16.mxu0 0
        %1332 = vmatpush1.bf16.msra.mxu0 %v1171
        %1333 = vmatprep.subr.bf16.mxu0 0
        %1334 = vmatpush1.bf16.msra.mxu0 %v1172
        %1335 = vmatprep.subr.bf16.mxu0 0
        %1336 = vmatpush1.bf16.msra.mxu0 %v1173
        %1337 = vmatprep.subr.bf16.mxu0 0
        %1338 = vmatpush1.bf16.msra.mxu0 %v1174
        %1339 = vmatprep.subr.bf16.mxu0 0
        %1340 = vmatpush1.bf16.msra.mxu0 %v1175
        %1341 = vmatprep.subr.bf16.mxu0 0
        %1342 = vmatpush1.bf16.msra.mxu0 %v1176
        %1343 = vmatprep.subr.bf16.mxu0 0
        %1344 = vmatpush1.bf16.msra.mxu0 %v1227
        %1345 = vmatprep.subr.bf16.mxu0 0
        %1346 = vmatpush1.bf16.msra.mxu0 0
        %1347 = vmatprep.subr.bf16.mxu0 0
        %1348 = vmatpush1.bf16.msra.mxu0 0
        %1349 = vmatprep.subr.bf16.mxu0 0
        %1350 = vmatpush1.bf16.msra.mxu0 0
        %1351 = vmatprep.subr.bf16.mxu0 0
        %1352 = vmatpush1.bf16.msra.mxu0 0
        %1353 = vmatprep.subr.bf16.mxu0 0
        %1354 = vmatpush1.bf16.msra.mxu0 0
        %1355 = vmatprep.subr.bf16.mxu0 0
        %1356 = vmatpush1.bf16.msra.mxu0 0
        %1357 = vmatprep.subr.bf16.mxu0 0
        %1358 = vmatpush1.bf16.msra.mxu0 0
        %1359 = vmatprep.mubr.bf16.mxu0 %v1220
        %1360 = vmatmul.mubr.bf16.gmra.mrb[0].mxu0 %v814
        %v1361 = vpop.f32.mrb[0].mxu0
        %v1362 = vadd.f32 %v1313, %v1361
        %v1363 = vpop.f32.mrb[0].mxu0
        %v1364 = vpop.f32.mrb[0].mxu0
        %v1365 = vadd.f32 %v1316, %v1364
        %v1366 = vpop.f32.mrb[0].mxu0
        %1367 = vmatprep.mubr.bf16.mxu0 %v1223
        %1368 = vmatmul.mubr.bf16.gmra.mrb[0].mxu0 %v820
        %v1369 = vpop.f32.mrb[0].mxu0
        %v1370 = vadd.f32 %v1321, %v1369
        %v1371 = vpop.f32.mrb[0].mxu0
        %v1372 = vpop.f32.mrb[0].mxu0
        %v1373 = vadd.f32 %v1324, %v1372
        %v1374 = vpop.f32.mrb[0].mxu0
        %1375 = vdwg.mxu0
        %v1376 = vld [vmem:[#allocation4] sm:$0x1]
        %v1378 = vlaneseq
        %v1379 = vshrl.u32 %v1378, 7
        %v1380 = vsub.s32 0, %v1379
        %v1381 = vrot.slane %v1376, %v1380
        %v1383 = vadd.f32 %v1362, %v1381
        %v1384 = vadd.f32 %v1365, %v1381
        %v1385 = vadd.f32 %v1370, %v1381
        %v1386 = vadd.f32 %v1373, %v1381
        %v1387 = vtanh.pop %v1383
        %v1388 = vtanh.pop %v1384
        %v1389 = vtanh.pop %v1385
        %v1390 = vtanh.pop %v1386
        %v1391 = vpack.c.bf16 %v1388, %v1387
        %v1392 = vpack.c.bf16 %v1390, %v1389
        %v1393 = vld [vmem:[%s6] sm:$0xf]
        %v1394 = vld [vmem:[%s6 + $0x4] sm:$0xf]
        %v1395 = vld [vmem:[%s6 + $0x8] sm:$0xf]
        %v1396 = vld [vmem:[%s6 + $0xc] sm:$0xf]
        %v1397 = vld [vmem:[%s6 + $0x10] sm:$0xf]
        %v1398 = vld [vmem:[%s6 + $0x14] sm:$0xf]
        %v1399 = vld [vmem:[%s6 + $0x18] sm:$0xf]
        %v1400 = vld [vmem:[%s6 + $0x1c] sm:$0xf]
        %v1401 = vld [vmem:[%s6 + $0x20] sm:$0xf]
        %v1402 = vld [vmem:[%s6 + $0x24] sm:$0xf]
        %v1403 = vld [vmem:[%s6 + $0x28] sm:$0xf]
        %v1404 = vld [vmem:[%s6 + $0x2c] sm:$0xf]
        %v1405 = vld [vmem:[%s6 + $0x30] sm:$0xf]
        %v1406 = vld [vmem:[%s6 + $0x34] sm:$0xf]
        %v1407 = vld [vmem:[%s6 + $0x38] sm:$0xf]
        %v1408 = vld [vmem:[%s6 + $0x3c] sm:$0xf]
        %v1409 = vld [vmem:[#allocation6] sm:$0x1]
        %v1411 = vlaneseq
        %v1412 = vshrl.u32 %v1411, 7
        %v1413 = vsub.s32 0, %v1412
        %v1414 = vrot.slane %v1409, %v1413
        %v1432 = vunpack.c.l.b16 %v1393
        %v1433 = vunpack.c.l.b16 %v1394
        %v1434 = vunpack.c.l.b16 %v1395
        %v1435 = vunpack.c.l.b16 %v1396
        %v1436 = vunpack.c.l.b16 %v1397
        %v1437 = vunpack.c.l.b16 %v1398
        %v1438 = vunpack.c.l.b16 %v1399
        %v1439 = vunpack.c.l.b16 %v1400
        %v1440 = vunpack.c.l.b16 %v1401
        %v1441 = vunpack.c.l.b16 %v1402
        %v1442 = vunpack.c.l.b16 %v1403
        %v1443 = vunpack.c.l.b16 %v1404
        %v1444 = vunpack.c.l.b16 %v1405
        %v1445 = vunpack.c.l.b16 %v1406
        %v1446 = vunpack.c.l.b16 %v1407
        %v1447 = vunpack.c.l.b16 %v1408
        %v1448 = vpack.c.b16 %v1433, %v1432
        %v1449 = vpack.c.b16 %v1435, %v1434
        %v1450 = vpack.c.b16 %v1437, %v1436
        %v1451 = vpack.c.b16 %v1439, %v1438
        %v1452 = vpack.c.b16 %v1441, %v1440
        %v1453 = vpack.c.b16 %v1443, %v1442
        %v1454 = vpack.c.b16 %v1445, %v1444
        %v1455 = vpack.c.b16 %v1447, %v1446
        %1464 = vmatprep.subr.bf16.mxu0 0
        %1465 = vmatpush1.bf16.msra.mxu0 %v1448
        %1466 = vmatprep.subr.bf16.mxu0 0
        %1467 = vmatpush1.bf16.msra.mxu0 %v1449
        %1468 = vmatprep.subr.bf16.mxu0 0
        %1469 = vmatpush1.bf16.msra.mxu0 %v1450
        %1470 = vmatprep.subr.bf16.mxu0 0
        %1471 = vmatpush1.bf16.msra.mxu0 %v1451
        %1472 = vmatprep.subr.bf16.mxu0 0
        %1473 = vmatpush1.bf16.msra.mxu0 %v1452
        %1474 = vmatprep.subr.bf16.mxu0 0
        %1475 = vmatpush1.bf16.msra.mxu0 %v1453
        %1476 = vmatprep.subr.bf16.mxu0 0
        %1477 = vmatpush1.bf16.msra.mxu0 %v1454
        %1478 = vmatprep.subr.bf16.mxu0 0
        %1479 = vmatpush1.bf16.msra.mxu0 %v1455
        %1480 = vmatprep.subr.bf16.mxu0 0
        %1481 = vmatpush1.bf16.msra.mxu0 0
        %1482 = vmatprep.subr.bf16.mxu0 0
        %1483 = vmatpush1.bf16.msra.mxu0 0
        %1484 = vmatprep.subr.bf16.mxu0 0
        %1485 = vmatpush1.bf16.msra.mxu0 0
        %1486 = vmatprep.subr.bf16.mxu0 0
        %1487 = vmatpush1.bf16.msra.mxu0 0
        %1488 = vmatprep.subr.bf16.mxu0 0
        %1489 = vmatpush1.bf16.msra.mxu0 0
        %1490 = vmatprep.subr.bf16.mxu0 0
        %1491 = vmatpush1.bf16.msra.mxu0 0
        %1492 = vmatprep.subr.bf16.mxu0 0
        %1493 = vmatpush1.bf16.msra.mxu0 0
        %1494 = vmatprep.subr.bf16.mxu0 0
        %1495 = vmatpush1.bf16.msra.mxu0 0
        %1496 = vmatprep.mubr.bf16.mxu0 0
        %1497 = vmatmul.mubr.bf16.gmra.mrb[0].mxu0 %v1391
        %v1498 = vpop.f32.mrb[0].mxu0
        %v1499 = vadd.f32 %v1414, %v1498
        %v1500 = vpop.f32.mrb[0].mxu0
        %v1501 = vpop.f32.mrb[0].mxu0
        %v1502 = vadd.f32 %v1414, %v1501
        %v1503 = vpop.f32.mrb[0].mxu0
        %1504 = vmatprep.mubr.bf16.mxu0 0
        %1505 = vmatmul.mubr.bf16.gmra.mrb[0].mxu0 %v1392
        %v1506 = vpop.f32.mrb[0].mxu0
        %v1507 = vadd.f32 %v1414, %v1506
        %v1508 = vpop.f32.mrb[0].mxu0
        %v1509 = vpop.f32.mrb[0].mxu0
        %v1510 = vadd.f32 %v1414, %v1509
        %v1511 = vpop.f32.mrb[0].mxu0
        %1512 = vdwg.mxu0
        %v1513 = vtanh.pop %v1499
        %v1514 = vtanh.pop %v1502
        %v1515 = vtanh.pop %v1507
        %v1516 = vtanh.pop %v1510
        %v1517 = vpack.c.bf16 %v1514, %v1513
        %v1518 = vpack.c.bf16 %v1516, %v1515
        %v1519 = vld [vmem:[%s8] sm:$0xf]
        %v1520 = vld [vmem:[%s8 + $0x4] sm:$0xf]
        %v1521 = vld [vmem:[%s8 + $0x8] sm:$0xf]
        %v1522 = vld [vmem:[%s8 + $0xc] sm:$0xf]
        %v1523 = vld [vmem:[%s8 + $0x10] sm:$0xf]
        %v1524 = vld [vmem:[%s8 + $0x14] sm:$0xf]
        %v1525 = vld [vmem:[%s8 + $0x18] sm:$0xf]
        %v1526 = vld [vmem:[%s8 + $0x1c] sm:$0xf]
        %v1527 = vld [vmem:[%s8 + $0x20] sm:$0xf]
        %v1528 = vld [vmem:[%s8 + $0x24] sm:$0xf]
        %v1529 = vld [vmem:[%s8 + $0x28] sm:$0xf]
        %v1530 = vld [vmem:[%s8 + $0x2c] sm:$0xf]
        %v1531 = vld [vmem:[%s8 + $0x30] sm:$0xf]
        %v1532 = vld [vmem:[%s8 + $0x34] sm:$0xf]
        %v1533 = vld [vmem:[%s8 + $0x38] sm:$0xf]
        %v1534 = vld [vmem:[%s8 + $0x3c] sm:$0xf]
        %v1535 = vld [vmem:[#allocation7] sm:$0x1]
        %v1537 = vlaneseq
        %v1538 = vshrl.u32 %v1537, 7
        %v1539 = vsub.s32 0, %v1538
        %v1540 = vrot.slane %v1535, %v1539
        %v1558 = vunpack.c.l.b16 %v1519
        %v1559 = vunpack.c.l.b16 %v1520
        %v1560 = vunpack.c.l.b16 %v1521
        %v1561 = vunpack.c.l.b16 %v1522
        %v1562 = vunpack.c.l.b16 %v1523
        %v1563 = vunpack.c.l.b16 %v1524
        %v1564 = vunpack.c.l.b16 %v1525
        %v1565 = vunpack.c.l.b16 %v1526
        %v1566 = vunpack.c.l.b16 %v1527
        %v1567 = vunpack.c.l.b16 %v1528
        %v1568 = vunpack.c.l.b16 %v1529
        %v1569 = vunpack.c.l.b16 %v1530
        %v1570 = vunpack.c.l.b16 %v1531
        %v1571 = vunpack.c.l.b16 %v1532
        %v1572 = vunpack.c.l.b16 %v1533
        %v1573 = vunpack.c.l.b16 %v1534
        %v1574 = vpack.c.b16 %v1559, %v1558
        %v1575 = vpack.c.b16 %v1561, %v1560
        %v1576 = vpack.c.b16 %v1563, %v1562
        %v1577 = vpack.c.b16 %v1565, %v1564
        %v1578 = vpack.c.b16 %v1567, %v1566
        %v1579 = vpack.c.b16 %v1569, %v1568
        %v1580 = vpack.c.b16 %v1571, %v1570
        %v1581 = vpack.c.b16 %v1573, %v1572
        %1590 = vmatprep.subr.bf16.mxu0 0
        %1591 = vmatpush1.bf16.msra.mxu0 %v1574
        %1592 = vmatprep.subr.bf16.mxu0 0
        %1593 = vmatpush1.bf16.msra.mxu0 %v1575
        %1594 = vmatprep.subr.bf16.mxu0 0
        %1595 = vmatpush1.bf16.msra.mxu0 %v1576
        %1596 = vmatprep.subr.bf16.mxu0 0
        %1597 = vmatpush1.bf16.msra.mxu0 %v1577
        %1598 = vmatprep.subr.bf16.mxu0 0
        %1599 = vmatpush1.bf16.msra.mxu0 %v1578
        %1600 = vmatprep.subr.bf16.mxu0 0
        %1601 = vmatpush1.bf16.msra.mxu0 %v1579
        %1602 = vmatprep.subr.bf16.mxu0 0
        %1603 = vmatpush1.bf16.msra.mxu0 %v1580
        %1604 = vmatprep.subr.bf16.mxu0 0
        %1605 = vmatpush1.bf16.msra.mxu0 %v1581
        %1606 = vmatprep.subr.bf16.mxu0 0
        %1607 = vmatpush1.bf16.msra.mxu0 0
        %1608 = vmatprep.subr.bf16.mxu0 0
        %1609 = vmatpush1.bf16.msra.mxu0 0
        %1610 = vmatprep.subr.bf16.mxu0 0
        %1611 = vmatpush1.bf16.msra.mxu0 0
        %1612 = vmatprep.subr.bf16.mxu0 0
        %1613 = vmatpush1.bf16.msra.mxu0 0
        %1614 = vmatprep.subr.bf16.mxu0 0
        %1615 = vmatpush1.bf16.msra.mxu0 0
        %1616 = vmatprep.subr.bf16.mxu0 0
        %1617 = vmatpush1.bf16.msra.mxu0 0
        %1618 = vmatprep.subr.bf16.mxu0 0
        %1619 = vmatpush1.bf16.msra.mxu0 0
        %1620 = vmatprep.subr.bf16.mxu0 0
        %1621 = vmatpush1.bf16.msra.mxu0 0
        %1622 = vmatprep.mubr.bf16.mxu0 0
        %1623 = vmatmul.mubr.bf16.gmra.mrb[0].mxu0 %v1517
        %v1624 = vpop.f32.mrb[0].mxu0
        %v1625 = vadd.f32 %v1540, %v1624
        %v1626 = vpop.f32.mrb[0].mxu0
        %v1627 = vpop.f32.mrb[0].mxu0
        %v1628 = vadd.f32 %v1540, %v1627
        %v1629 = vpop.f32.mrb[0].mxu0
        %1630 = vmatprep.mubr.bf16.mxu0 0
        %1631 = vmatmul.mubr.bf16.gmra.mrb[0].mxu0 %v1518
        %v1632 = vpop.f32.mrb[0].mxu0
        %v1633 = vadd.f32 %v1540, %v1632
        %v1634 = vpop.f32.mrb[0].mxu0
        %v1635 = vpop.f32.mrb[0].mxu0
        %v1636 = vadd.f32 %v1540, %v1635
        %v1637 = vpop.f32.mrb[0].mxu0
        %1638 = vdwg.mxu0
        %v1639 = vsub.f32 0.0, %v1625
        %v1640 = vsub.f32 0.0, %v1628
        %v1641 = vsub.f32 0.0, %v1633
        %v1642 = vsub.f32 0.0, %v1636
        %v1643 = vmul.f32 %v1639, 1.442695
        %v1644 = vpow.pop %v1643
        %v1645 = vmul.f32 %v1640, 1.442695
        %v1646 = vpow.pop %v1645
        %v1647 = vmul.f32 %v1641, 1.442695
        %v1648 = vpow.pop %v1647
        %v1649 = vmul.f32 %v1642, 1.442695
        %v1650 = vpow.pop %v1649
        %v1651 = vadd.f32 %v1644, 1.0
        %v1652 = vadd.f32 %v1646, 1.0
        %v1653 = vadd.f32 %v1648, 1.0
        %v1654 = vadd.f32 %v1650, 1.0
        %v1655 = vrcp.pop %v1651
        %v1656 = vrcp.pop %v1652
        %v1657 = vrcp.pop %v1653
        %v1658 = vrcp.pop %v1654
        %v1659 = vpack.c.bf16 %v1656, %v1655
        %v1660 = vpack.c.bf16 %v1658, %v1657
        %v1663 = vunpack.c.l.b16 %v1659
        %v1664 = vunpack.c.h.b16 %v1659
        %v1665 = vunpack.c.l.b16 %v1660
        %v1666 = vunpack.c.h.b16 %v1660
        %v1667 = vpack.c.b16 %v1663, %v1663
        %v1668 = vpack.c.b16 %v1664, %v1664
        %v1669 = vpack.c.b16 %v1665, %v1665
        %v1670 = vpack.c.b16 %v1666, %v1666
        %1675 = vst [vmem:[%s414] sm:$0xf] %v1667
        %1676 = vst [vmem:[%s414 + $0x4] sm:$0xf] %v1668
        %1677 = vst [vmem:[%s414 + $0x8] sm:$0xf] %v1669
        %1678 = vst [vmem:[%s414 + $0xc] sm:$0xf] %v1670
        %s1679 = smul.u32 4, %s24
        %p1680 = scmp.lt.s32.totalorder %s1679, 7
        %s1681 = scalar_select %p1680, %s1679, 7
        %s1682 = smul.addr %s1681, 4
        %s1683 = scalar_lea.vmem %s10, %s1682
        // Predicated region
        $region77: #{discriminator_forward.1} parent=59 // pred_check
          %p1684 = pneg %p257
        $region78: #{discriminator_forward.1} parent=59 // pred_check_branch
          %1686 = sbr.rel (%p1684) target = $region80
        $region79: #{discriminator_forward.1} parent=59 // pred_region
          %s1687 = smul.u32 4, %s24
        $region80: #{discriminator_forward.1} parent=59 // pred_fallthru
          _
      $region60: #{discriminator_forward.1} parent=5 // pred_fallthru
        _
      %p1688 = scmp.le.s32.totalorder 2, %s19
      // Predicated region
      $region81: #{discriminator_forward.1} parent=5 // pred_check
        %p1689 = pneg %p1688
      $region82: #{discriminator_forward.1} parent=5 // pred_check_branch
        %1691 = sbr.rel (%p1689) target = $region84
      $region83: #{discriminator_forward.1} parent=5 // pred_region
        %s1692 = ssub.s32 %s19, 2
        // Predicated region
        $region85: #{discriminator_forward.1} parent=83 // pred_check
          %p1693 = pneg %p263
        $region86: #{discriminator_forward.1} parent=83 // pred_check_branch
          %1695 = sbr.rel (%p1693) target = $region88
        $region87: #{discriminator_forward.1} parent=83 // pred_region
          %s1696 = smul.u32 4, %s25
          %p1697 = scmp.lt.s32.totalorder %s1696, 7
          %s1698 = scalar_select %p1697, %s1696, 7
          %s1699 = smul.addr %s1698, 4
          %s1700 = scalar_lea.vmem %s10, %s1699
        $region88: #{discriminator_forward.1} parent=83 // pred_fallthru
          _
      $region84: #{discriminator_forward.1} parent=5 // pred_fallthru
        _
    $region6: #{discriminator_forward.1} parent=1 // loop_footer
      %s23 = sadd.s32 1, %s19
    $region7: #{discriminator_forward.1} parent=1 // loop_footer_branch
      %18 = sbr.rel target = $region3
    $region8: #{discriminator_forward.1} parent=1 // loop_exit
      _
    %1701 = vsyncpa [#allocation3], 1
    %s1702 = scalar_lea.sflag [#allocation3], 1
    %1703 = vsyncpa %s1702, 1
    %1704 = vsyncpa [#allocation5], 1
    %1705 = vsyncpa [#allocation8], 1

</llo_original>
